<compile_context>
chip_gen: v5e
topology: v5e:2x2
jax: 0.10.0
libtpu: 0.0.40
codegen_flags: <defaults>
</compile_context>

<pallas_src>
import jax
import jax.numpy as jnp
from jax.experimental import pallas as pl
from jax.experimental.pallas import tpu as pltpu

EPS = 1e-5  # nn.BatchNorm2d default eps


def _round_up(a, b):
    return (a + b - 1) // b * b


def _make_kernels(kh, kw, th, wo, cin, cout_pad, rc_rows):
    """Build (stats_kernel, normalize_kernel) closing over static shape parameters."""
    K = kh * kw * cin
    n_chunks = th // rc_rows
    rc = rc_rows * wo                     # output rows handled per in-kernel chunk

    def conv_chunk(x_ref, w_ref, c):
        # x_ref: (th + kh - 1, Wp, Cin) halo tile.  Returns (rc, cout_pad) f32.
        r0 = c * rc_rows
        pieces = []
        for dy in range(kh):
            rows = x_ref[r0 + dy:r0 + dy + rc_rows, :, :]         # (rc_rows, Wp, Cin)
            for dx in range(kw):
                pieces.append(rows[:, dx:dx + wo, :])             # (rc_rows, wo, Cin)
        # In-kernel im2col: one lane-axis concat -> a single MXU dot with K = kh*kw*Cin.
        lhs = jnp.concatenate(pieces, axis=-1).reshape(rc, K)
        return jnp.dot(lhs, w_ref[...], preferred_element_type=jnp.float32)

    def stats_kernel(x_ref, w_ref, stat_ref):
        s = jnp.zeros((1, cout_pad), jnp.float32)
        q = jnp.zeros((1, cout_pad), jnp.float32)
        for c in range(n_chunks):                                 # static unroll
            acc = conv_chunk(x_ref, w_ref, c)
            s = s + jnp.sum(acc, axis=0, keepdims=True)
            q = q + jnp.sum(acc * acc, axis=0, keepdims=True)
        stat_ref[0:1, :] = s
        stat_ref[1:2, :] = q

    def normalize_kernel(x_ref, w_ref, scale_ref, shift_ref, o_ref):
        scale = scale_ref[...]                                    # (1, cout_pad) f32
        shift = shift_ref[...]
        for c in range(n_chunks):                                 # static unroll
            acc = conv_chunk(x_ref, w_ref, c)
            y = jnp.maximum(acc * scale + shift, 0.0)
            o_ref[c * rc:(c + 1) * rc, :] = y.astype(o_ref.dtype)

    return stats_kernel, normalize_kernel


def conv2d_batchnorm_relu(x, weight, bias, gamma, beta, *, stride, padding,
                          compute_dtype=jnp.bfloat16, out_dtype=jnp.float32,
                          target_rows=512, vmem_cap_bytes=40 * 2 ** 20):
    """x: (N, Cin, H, W). weight: (Cout, Cin, kh, kw). Returns (N, Cout, Ho, Wo) in out_dtype."""
    del bias  # exactly cancelled by training-mode BN mean subtraction -> dead work

    N, Cin, H, W = x.shape
    Cout, _, kh, kw = weight.shape
    if stride != 1:
        # TODO(synk): stride > 1 needs strided column windows in the in-kernel im2col.
        raise NotImplementedError("only stride=1 is supported by this fused kernel")
    Ho = H + 2 * padding - kh + 1
    Wo = W + 2 * padding - kw + 1
    Wp = W + 2 * padding
    cout_pad = _round_up(Cout, 128)            # lane-dense output channels
    K = kh * kw * Cin                          # fused contraction depth
    M = N * Ho * Wo

    in_item = jnp.dtype(compute_dtype).itemsize
    out_item = jnp.dtype(out_dtype).itemsize
    sub = 8 if in_item == 4 else 16            # sublane packing of the compute dtype

    def tile_bytes(th):
        # VMEM-layout-aware estimate: 2x-buffered halo input block + resident weights
        # + 2x-buffered output block + BN vectors.
        in_blk = (th + kh - 1) * _round_up(Wp, sub) * _round_up(Cin, 128) * in_item
        w_blk = _round_up(K, sub) * cout_pad * in_item
        out_blk = th * Wo * cout_pad * out_item
        return 2 * in_blk + w_blk + 2 * out_blk + 4 * cout_pad * 4

    # Pick th | Ho: prefer large tiles (~target_rows output rows), tm = th*Wo a multiple
    # of 8 (full-width stores), and a block set that fits the (v7x-safe) VMEM budget.
    divisors = [d for d in range(Ho, 0, -1) if Ho % d == 0]
    th = None
    for want_aligned in (True, False):
        for d in divisors:
            if d * Wo > max(target_rows, Wo):
                continue
            if 2 * tile_bytes(d) > vmem_cap_bytes:
                continue
            if want_aligned and (d * Wo) % 8 != 0:
                continue
            th = d
            break
        if th is not None:
            break
    if th is None:
        th = 1  # TODO(synk): very wide rows / huge Cin also need column tiling.
    n_ht = Ho // th
    tm = th * Wo
    n_tiles = N * n_ht

    # Chunk rows inside the kernel so the live f32 accumulator stays <= ~256 x cout_pad.
    rc_rows = th
    while rc_rows > 1 and rc_rows * Wo > 256:
        rc_rows -= 1
        while th % rc_rows:
            rc_rows -= 1

    # --- glue: NCHW -> padded NHWC, re-tiled into overlapping halo-row slabs ---
    x_nhwc = jnp.transpose(x, (0, 2, 3, 1)).astype(compute_dtype)
    xp = jnp.pad(x_nhwc, ((0, 0), (padding, padding), (padding, padding), (0, 0)))
    xp_tiles = jnp.stack(
        [xp[:, t * th:t * th + th + kh - 1] for t in range(n_ht)], axis=1
    )                                              # (N, n_ht, th+kh-1, Wp, Cin)

    # Weights: (Cout, Cin, kh, kw) -> (kh*kw*Cin, cout_pad); (dy, dx, cin) row ordering
    # matches the in-kernel im2col concat order.
    w_t = jnp.transpose(weight, (2, 3, 1, 0)).reshape(K, Cout)
    w_pad = jnp.pad(w_t, ((0, 0), (0, cout_pad - Cout))).astype(compute_dtype)

    stats_kernel, normalize_kernel = _make_kernels(kh, kw, th, Wo, Cin, cout_pad, rc_rows)

    x_spec = pl.BlockSpec((None, None, th + kh - 1, Wp, Cin),
                          lambda n, t: (n, t, 0, 0, 0))
    w_spec = pl.BlockSpec((K, cout_pad), lambda n, t: (0, 0))
    vmem_limit = int(min(vmem_cap_bytes, max(16 * 2 ** 20, 2 * tile_bytes(th))))
    cparams = pltpu.CompilerParams(
        # Both axes independent in both passes -> v7x can use both TensorCores.
        dimension_semantics=("parallel", "parallel"),
        vmem_limit_bytes=vmem_limit)

    # --- pass 1: per-tile partial BN statistics (sum, sum-of-squares); no big output ---
    partial = pl.pallas_call(
        stats_kernel,
        out_shape=jax.ShapeDtypeStruct((n_tiles, 2, cout_pad), jnp.float32),
        grid=(N, n_ht),
        in_specs=[x_spec, w_spec],
        out_specs=pl.BlockSpec((None, 2, cout_pad),
                               lambda n, t: (n * n_ht + t, 0, 0)),
        compiler_params=cparams,
    )(xp_tiles, w_pad)

    # --- tiny XLA join: mean / var -> BN scale & shift (all f32) ---
    sums = jnp.sum(partial, axis=0)                 # (2, cout_pad)
    mean = sums[0] / M
    var = sums[1] / M - mean * mean                 # biased variance (training BN)
    # TODO(synk): switch to a centered second pass / Welford if E[y^2]-E[y]^2 cancellation
    # ever becomes a precision problem for large-mean activations.
    inv_std = jax.lax.rsqrt(var + EPS)
    g_pad = jnp.pad(gamma.astype(jnp.float32), (0, cout_pad - Cout))
    b_pad = jnp.pad(beta.astype(jnp.float32), (0, cout_pad - Cout))
    scale = (g_pad * inv_std).reshape(1, cout_pad)
    shift = (b_pad - mean * g_pad * inv_std).reshape(1, cout_pad)

    # --- pass 2: recompute conv tile, apply BN scale/shift + ReLU, single output write ---
    bn_spec = pl.BlockSpec((1, cout_pad), lambda n, t: (0, 0))
    out_flat = pl.pallas_call(
        normalize_kernel,
        out_shape=jax.ShapeDtypeStruct((M, cout_pad), out_dtype),
        grid=(N, n_ht),
        in_specs=[x_spec, w_spec, bn_spec, bn_spec],
        out_specs=pl.BlockSpec((tm, cout_pad), lambda n, t: (n * n_ht + t, 0)),
        compiler_params=cparams,
    )(xp_tiles, w_pad, scale, shift)

    # (M, cout_pad) -> NHWC (real channels) -> NCHW once at the module boundary.
    out = out_flat[:, :Cout].reshape(N, Ho, Wo, Cout)
    return jnp.transpose(out, (0, 3, 1, 2))


def reference(x, weight, bias, gamma, beta, *, stride, padding):
    """Pure-JAX reference of Conv2d(bias) + BatchNorm2d(train) + ReLU."""
    y = jax.lax.conv_general_dilated(
        x, weight, (stride, stride),
        [(padding, padding), (padding, padding)],
        dimension_numbers=("NCHW", "OIHW", "NCHW"),
        precision=jax.lax.Precision.HIGHEST,
    ) + bias.reshape(1, -1, 1, 1)
    mean = y.mean(axis=(0, 2, 3), keepdims=True)
    var = y.var(axis=(0, 2, 3), keepdims=True)       # biased variance (training BN)
    yn = (y - mean) * jax.lax.rsqrt(var + EPS) * gamma.reshape(1, -1, 1, 1) \
         + beta.reshape(1, -1, 1, 1)
    return jnp.maximum(yn, 0.0)


if __name__ == "__main__":
    # Module config: conv2DBatchNormRelu(in_channels=4, n_filters=8, k_size=3, stride=1, padding=1)
    N, Cin, H, W = 2, 4, 16, 16
    Cout, k, stride, padding = 8, 3, 1, 1

    key = jax.random.PRNGKey(0)
    kx, kw_, kb, kg = jax.random.split(key, 4)

    x = jax.random.normal(kx, (N, Cin, H, W), dtype=jnp.float32)

    # Deterministic "kaiming"-style init: weight ~ N(0, sqrt(2 / fan_in))
    fan_in = Cin * k * k
    weight = jax.random.normal(kw_, (Cout, Cin, k, k), jnp.float32) * jnp.sqrt(2.0 / fan_in)
    bias = 0.1 * jax.random.normal(kb, (Cout,), jnp.float32)
    gamma = 1.0 + 0.02 * jax.random.normal(kg, (Cout,), jnp.float32)   # BN weight
    beta = jnp.zeros((Cout,), jnp.float32)                             # BN bias

    ref = reference(x, weight, bias, gamma, beta, stride=stride, padding=padding)

    # f32 data path.
    out_f32 = conv2d_batchnorm_relu(x, weight, bias, gamma, beta,
                                    stride=stride, padding=padding,
                                    compute_dtype=jnp.float32, out_dtype=jnp.float32)
    out_f32 = jax.block_until_ready(out_f32)
    assert out_f32.shape == (N, Cout, H, W), out_f32.shape
    err_f32 = float(jnp.max(jnp.abs(out_f32 - ref)))
    assert err_f32 < 2e-2, err_f32

    # bf16 MXU operands + bf16 output (halved HBM write traffic); BN stats stay f32.
    out_bf16 = conv2d_batchnorm_relu(x, weight, bias, gamma, beta,
                                     stride=stride, padding=padding,
                                     compute_dtype=jnp.bfloat16, out_dtype=jnp.bfloat16)
    out_bf16 = jax.block_until_ready(out_bf16)
    assert out_bf16.shape == (N, Cout, H, W), out_bf16.shape
    err_bf16 = float(jnp.max(jnp.abs(out_bf16.astype(jnp.float32) - ref)))
    assert err_bf16 < 1e-1, err_bf16

    print("KERNEL_OK")
</pallas_src>

<mosaic_0001>
module attributes {stable_mosaic.version = 11 : i64} {
  func.func @stats_kernel(%arg0: i32, %arg1: i32, %arg2: memref<1x1x18x18x4xf32, #tpu.memory_space<vmem>>, %arg3: memref<36x128xf32, #tpu.memory_space<vmem>>, %arg4: memref<1x2x128xf32, #tpu.memory_space<vmem>>) attributes {dimension_semantics = [#tpu.dimension_semantics<parallel>, #tpu.dimension_semantics<parallel>], iteration_bounds = array<i64: 2, 1>, scalar_prefetch = 0 : i64, scratch_operands = 0 : i64, tpu.core_type = #tpu.core_type<tc>, window_params = [{transform_indices = @transform_0, window_bounds = array<i64: 1, 1, 18, 18, 4>}, {pipeline_mode = #tpu.pipeline_mode<synchronous>, transform_indices = @transform_1, window_bounds = array<i64: 36, 128>}, {transform_indices = @transform_2, window_bounds = array<i64: 1, 2, 128>}]} {
    %cst = arith.constant 0.000000e+00 : f32
    %0 = vector.broadcast %cst : f32 to vector<1x128xf32>
    %cst_0 = arith.constant 0.000000e+00 : f32
    %1 = vector.broadcast %cst_0 : f32 to vector<1x128xf32>
    %c0 = arith.constant 0 : index
    %c0_1 = arith.constant 0 : index
    %c0_2 = arith.constant 0 : index
    %c0_3 = arith.constant 0 : index
    %c0_4 = arith.constant 0 : index
    %2 = vector.load %arg2[%c0, %c0_1, %c0_2, %c0_3, %c0_4] : memref<1x1x18x18x4xf32, #tpu.memory_space<vmem>>, vector<1x1x16x18x4xf32>
    %3 = vector.shape_cast %2 : vector<1x1x16x18x4xf32> to vector<16x18x4xf32>
    %4 = vector.extract_strided_slice %3 {offsets = [0, 0, 0], sizes = [16, 16, 4], strides = [1, 1, 1]} : vector<16x18x4xf32> to vector<16x16x4xf32>
    %5 = vector.extract_strided_slice %3 {offsets = [0, 1, 0], sizes = [16, 16, 4], strides = [1, 1, 1]} : vector<16x18x4xf32> to vector<16x16x4xf32>
    %6 = vector.extract_strided_slice %3 {offsets = [0, 2, 0], sizes = [16, 16, 4], strides = [1, 1, 1]} : vector<16x18x4xf32> to vector<16x16x4xf32>
    %c0_5 = arith.constant 0 : index
    %c0_6 = arith.constant 0 : index
    %c1 = arith.constant 1 : index
    %c0_7 = arith.constant 0 : index
    %c0_8 = arith.constant 0 : index
    %7 = vector.load %arg2[%c0_5, %c0_6, %c1, %c0_7, %c0_8] : memref<1x1x18x18x4xf32, #tpu.memory_space<vmem>>, vector<1x1x16x18x4xf32>
    %8 = vector.shape_cast %7 : vector<1x1x16x18x4xf32> to vector<16x18x4xf32>
    %9 = vector.extract_strided_slice %8 {offsets = [0, 0, 0], sizes = [16, 16, 4], strides = [1, 1, 1]} : vector<16x18x4xf32> to vector<16x16x4xf32>
    %10 = vector.extract_strided_slice %8 {offsets = [0, 1, 0], sizes = [16, 16, 4], strides = [1, 1, 1]} : vector<16x18x4xf32> to vector<16x16x4xf32>
    %11 = vector.extract_strided_slice %8 {offsets = [0, 2, 0], sizes = [16, 16, 4], strides = [1, 1, 1]} : vector<16x18x4xf32> to vector<16x16x4xf32>
    %c0_9 = arith.constant 0 : index
    %c0_10 = arith.constant 0 : index
    %c2 = arith.constant 2 : index
    %c0_11 = arith.constant 0 : index
    %c0_12 = arith.constant 0 : index
    %12 = vector.load %arg2[%c0_9, %c0_10, %c2, %c0_11, %c0_12] : memref<1x1x18x18x4xf32, #tpu.memory_space<vmem>>, vector<1x1x16x18x4xf32>
    %13 = vector.shape_cast %12 : vector<1x1x16x18x4xf32> to vector<16x18x4xf32>
    %14 = vector.extract_strided_slice %13 {offsets = [0, 0, 0], sizes = [16, 16, 4], strides = [1, 1, 1]} : vector<16x18x4xf32> to vector<16x16x4xf32>
    %15 = vector.extract_strided_slice %13 {offsets = [0, 1, 0], sizes = [16, 16, 4], strides = [1, 1, 1]} : vector<16x18x4xf32> to vector<16x16x4xf32>
    %16 = vector.extract_strided_slice %13 {offsets = [0, 2, 0], sizes = [16, 16, 4], strides = [1, 1, 1]} : vector<16x18x4xf32> to vector<16x16x4xf32>
    %17 = tpu.concatenate %4, %5, %6, %9, %10, %11, %14, %15, %16 in 2 : vector<16x16x4xf32>, vector<16x16x4xf32>, vector<16x16x4xf32>, vector<16x16x4xf32>, vector<16x16x4xf32>, vector<16x16x4xf32>, vector<16x16x4xf32>, vector<16x16x4xf32>, vector<16x16x4xf32> -> vector<16x16x36xf32>
    %18 = vector.shape_cast %17 : vector<16x16x36xf32> to vector<256x36xf32>
    %c0_13 = arith.constant 0 : index
    %c0_14 = arith.constant 0 : index
    %19 = vector.load %arg3[%c0_13, %c0_14] : memref<36x128xf32, #tpu.memory_space<vmem>>, vector<36x128xf32>
    %cst_15 = arith.constant dense<0.000000e+00> : vector<256x128xf32>
    %20 = tpu.matmul %18, %19, %cst_15 {dimension_numbers = #tpu.dot_dimension_numbers<[1], [0], [0], [1], [0, 0, 1, 1], [], []>} : vector<256x36xf32>, vector<36x128xf32>, vector<256x128xf32> -> vector<256x128xf32>
    %cst_16 = arith.constant dense<0.000000e+00> : vector<128xf32>
    %21 = vector.multi_reduction <add>, %20, %cst_16 [0] : vector<256x128xf32> to vector<128xf32>
    %22 = vector.shape_cast %21 : vector<128xf32> to vector<1x128xf32>
    %23 = arith.addf %0, %22 : vector<1x128xf32>
    %24 = arith.mulf %20, %20 : vector<256x128xf32>
    %cst_17 = arith.constant dense<0.000000e+00> : vector<128xf32>
    %25 = vector.multi_reduction <add>, %24, %cst_17 [0] : vector<256x128xf32> to vector<128xf32>
    %26 = vector.shape_cast %25 : vector<128xf32> to vector<1x128xf32>
    %27 = arith.addf %1, %26 : vector<1x128xf32>
    %c0_18 = arith.constant 0 : index
    %c0_19 = arith.constant 0 : index
    %c0_20 = arith.constant 0 : index
    %28 = vector.load %arg4[%c0_18, %c0_19, %c0_20] : memref<1x2x128xf32, #tpu.memory_space<vmem>>, vector<1x1x128xf32>
    %29 = vector.shape_cast %28 : vector<1x1x128xf32> to vector<1x128xf32>
    %30 = vector.shape_cast %23 : vector<1x128xf32> to vector<1x1x128xf32>
    tpu.vector_store %arg4[%c0_18, %c0_19, %c0_20], %30 {strides = array<i32>} : memref<1x2x128xf32, #tpu.memory_space<vmem>>, vector<1x1x128xf32>,
    %c0_21 = arith.constant 0 : index
    %c1_22 = arith.constant 1 : index
    %c0_23 = arith.constant 0 : index
    %31 = vector.load %arg4[%c0_21, %c1_22, %c0_23] : memref<1x2x128xf32, #tpu.memory_space<vmem>>, vector<1x1x128xf32>
    %32 = vector.shape_cast %31 : vector<1x1x128xf32> to vector<1x128xf32>
    %33 = vector.shape_cast %27 : vector<1x128xf32> to vector<1x1x128xf32>
    tpu.vector_store %arg4[%c0_21, %c1_22, %c0_23], %33 {strides = array<i32>} : memref<1x2x128xf32, #tpu.memory_space<vmem>>, vector<1x1x128xf32>,
    return
  }
  func.func @transform_0(%arg0: i32, %arg1: i32) -> (i32, i32, i32, i32, i32) {
    %c0_i32 = arith.constant 0 : i32
    %c0_i32_0 = arith.constant 0 : i32
    %c0_i32_1 = arith.constant 0 : i32
    %c0_i32_2 = arith.constant 0 : i32
    return %arg0, %arg1, %c0_i32, %c0_i32_0, %c0_i32_1 : i32, i32, i32, i32, i32
  }
  func.func @transform_1(%arg0: i32, %arg1: i32) -> (i32, i32) {
    %c0_i32 = arith.constant 0 : i32
    %c0_i32_0 = arith.constant 0 : i32
    %c0_i32_1 = arith.constant 0 : i32
    return %c0_i32, %c0_i32_0 : i32, i32
  }
  func.func @transform_2(%arg0: i32, %arg1: i32) -> (i32, i32, i32) {
    %c1_i32 = arith.constant 1 : i32
    %0 = arith.muli %arg0, %c1_i32 : i32
    %1 = arith.addi %0, %arg1 : i32
    %c0_i32 = arith.constant 0 : i32
    %c0_i32_0 = arith.constant 0 : i32
    %c0_i32_1 = arith.constant 0 : i32
    return %1, %c0_i32, %c0_i32_0 : i32, i32, i32
  }
}

</mosaic_0001>

<llo_original>
// kernel: tpu_custom_call.1
$region0: #{tpu_custom_call.1}
  #allocation0 [shape = 'u32[]', space=smem, size = 0x4, offset = 0x4, fixed_abs, tag = 'smem constant byte address 0x4 - core index']
  #allocation1 [shape = 'u32[72,128]{1,0:T(1,128)}', space=vmem, size = 0x9000, scoped, tag = 'internal scratch']
  %s0 = inlined_call_operand.vmem [shape: f32[2,1,18,18,4], index: 0, kind: input, shape index: {}]
  %s1 = inlined_call_operand.vmem [shape: f32[36,128], index: 1, kind: input, shape index: {}]
  %s2 = inlined_call_operand.hbm [shape: f32[2,2,128], index: 2, kind: output, shape index: {}]
  %s3 = sld [smem:[#allocation0]]
  $region41: #{tpu_custom_call.1} parent=0
    _
  %s5 = ssub.s32 1, %s3
  %s6 = scalar_select 0, %s5, %s3
  $region1: #{tpu_custom_call.1} parent=0
    #allocation2 [shape = 'u8[2048]{0}', space=vmem, size = 0x800, scoped, tag = 'output window, operand 0']
    #allocation3 [shape = 's32[2]{0}', space=sflag, size = 0x8, scoped, tag = 'scoped memory for tpu_custom_call.1']
    %7 = vsyncpa [#allocation3], 0
    %s8 = scalar_lea.sflag [#allocation3], 1
    %9 = vsyncpa %s8, 0
    loop: start=0, step=1, limit=4
    $region2: #{tpu_custom_call.1} parent=1 // loop_pre_header
      _
    $region3: #{tpu_custom_call.1} parent=1 // loop_header
      %s11 = sphi 0, %s15
      %p12 = scmp.ge.s32.totalorder %s11, 4
      %s18 = sphi 0, %s30
      %s19 = sphi 0, %s26
      %s20 = sphi 0, %s18
      %s21 = sphi 0, %s19
      %s22 = sphi 0, %s20
      %s23 = sphi 0, %s21
      %s35 = sphi 0, %s37
      %s38 = sphi 0, %s35
      %s39 = sphi 0, %s38
      %s55 = sphi 0, %s39
      %s59 = sphi 0, %s59
      %s61 = sphi 0, %s59
      %s62 = sphi 0, %s61
      %s76 = sphi 0, %s62
      %s84 = sphi 0, %s86
      %s87 = sphi 0, %s84
      %s88 = sphi 0, %s87
      %s104 = sphi 0, %s88
    $region4: #{tpu_custom_call.1} parent=1 // loop_header_branch
      %14 = sbr.rel (%p12) target = $region8
    $region5: #{tpu_custom_call.1} parent=1 // loop_body
      %s16 = ssub.s32 %s11, 1
      %s17 = ssub.s32 %s11, 2
      %s24 = sadd.s32 1, %s19
      %p25 = scmp.ge.s32.totalorder %s24, 1
      %s26 = scalar_select %p25, 0, %s24
      %s27 = sadd.s32 1, %s18
      %s28 = scalar_select %p25, %s27, %s18
      %p29 = scmp.ge.s32.totalorder %s28, 2
      %s30 = scalar_select %p29, 0, %s28
      %s31 = ssub.s32 %s18, %s30
      %s32 = ssub.s32 %s19, %s26
      %s33 = sor.u32 %s31, %s32
      %p34 = scmp.eq.s32.totalorder %s33, 0
      %s36 = sadd.s32 %s35, 1
      %s37 = scalar_select %p34, %s35, %s36
      %p40 = pneg %p34
      %p41 = scmp.eq.s32.totalorder %s11, 1
      %p42 = por %p40, %p41
      %p43 = scmp.ne.s32.totalorder %s35, %s38
      %p44 = scmp.eq.s32.totalorder %s11, 0
      %p45 = por %p43, %p44
      %p46 = scmp.ne.s32.totalorder %s35, %s38
      %p47 = scmp.eq.s32.totalorder %s16, 1
      %p48 = por %p46, %p47
      %p49 = scmp.ne.s32.totalorder %s38, %s39
      %p50 = scmp.eq.s32.totalorder %s16, 0
      %p51 = por %p49, %p50
      %p52 = scmp.ne.s32.totalorder %s38, %s39
      %p53 = scmp.eq.s32.totalorder %s17, 1
      %p54 = por %p52, %p53
      %p56 = scmp.ne.s32.totalorder %s39, %s55
      %p57 = scmp.eq.s32.totalorder %s17, 0
      %p58 = por %p56, %p57
      %s60 = sadd.s32 %s59, 1
      %p63 = scmp.eq.s32.totalorder %s11, 1
      %p64 = scmp.ne.s32.totalorder %s59, %s61
      %p65 = scmp.eq.s32.totalorder %s11, 0
      %p66 = por %p64, %p65
      %p67 = scmp.ne.s32.totalorder %s59, %s61
      %p68 = scmp.eq.s32.totalorder %s16, 1
      %p69 = por %p67, %p68
      %p70 = scmp.ne.s32.totalorder %s61, %s62
      %p71 = scmp.eq.s32.totalorder %s16, 0
      %p72 = por %p70, %p71
      %p73 = scmp.ne.s32.totalorder %s61, %s62
      %p74 = scmp.eq.s32.totalorder %s17, 1
      %p75 = por %p73, %p74
      %p77 = scmp.ne.s32.totalorder %s62, %s76
      %p78 = scmp.eq.s32.totalorder %s17, 0
      %p79 = por %p77, %p78
      %s80 = sadd.s32 %s18, %s19
      %s81 = sadd.s32 %s30, %s26
      %s82 = ssub.s32 %s80, %s81
      %p83 = scmp.eq.s32.totalorder %s82, 0
      %s85 = sadd.s32 %s84, 1
      %s86 = scalar_select %p83, %s84, %s85
      %p89 = pneg %p83
      %p90 = scmp.eq.s32.totalorder %s11, 1
      %p91 = por %p89, %p90
      %p92 = scmp.ne.s32.totalorder %s84, %s87
      %p93 = scmp.eq.s32.totalorder %s11, 0
      %p94 = por %p92, %p93
      %p95 = scmp.ne.s32.totalorder %s84, %s87
      %p96 = scmp.eq.s32.totalorder %s16, 1
      %p97 = por %p95, %p96
      %p98 = scmp.ne.s32.totalorder %s87, %s88
      %p99 = scmp.eq.s32.totalorder %s16, 0
      %p100 = por %p98, %p99
      %p101 = scmp.ne.s32.totalorder %s87, %s88
      %p102 = scmp.eq.s32.totalorder %s17, 1
      %p103 = por %p101, %p102
      %p105 = scmp.ne.s32.totalorder %s88, %s104
      %p106 = scmp.eq.s32.totalorder %s17, 0
      %p107 = por %p105, %p106
      %p108 = scmp.le.s32.totalorder 1, %s11
      %p109 = scmp.lt.s32.totalorder %s11, 3
      %p110 = pnand %p108, %p109
      %p111 = pneg %p110
      // Predicated region
      $region9: #{tpu_custom_call.1} parent=5 // pred_check
        _
      $region10: #{tpu_custom_call.1} parent=5 // pred_check_branch
        %113 = sbr.rel (%p110) target = $region12
      $region11: #{tpu_custom_call.1} parent=5 // pred_region
        %s114 = ssub.s32 %s11, 1
        // Predicated region
        $region13: #{tpu_custom_call.1} parent=11 // pred_check
          %p115 = pneg %p72
        $region14: #{tpu_custom_call.1} parent=11 // pred_check_branch
          %117 = sbr.rel (%p115) target = $region16
        $region15: #{tpu_custom_call.1} parent=11 // pred_region
          _
        $region16: #{tpu_custom_call.1} parent=11 // pred_fallthru
          _
      $region12: #{tpu_custom_call.1} parent=5 // pred_fallthru
        _
      %p118 = scmp.lt.s32.totalorder %s11, 2
      // Predicated region
      $region17: #{tpu_custom_call.1} parent=5 // pred_check
        %p119 = pneg %p118
      $region18: #{tpu_custom_call.1} parent=5 // pred_check_branch
        %121 = sbr.rel (%p119) target = $region20
      $region19: #{tpu_custom_call.1} parent=5 // pred_region
        // Predicated region
        $region21: #{tpu_custom_call.1} parent=19 // pred_check
          %p122 = pneg %p45
        $region22: #{tpu_custom_call.1} parent=19 // pred_check_branch
          %124 = sbr.rel (%p122) target = $region24
        $region23: #{tpu_custom_call.1} parent=19 // pred_region
          %p125 = scmp.lt.s32.totalorder %s18, 1
          %s126 = scalar_select %p125, %s18, 1
          %p127 = scmp.lt.s32.totalorder %s19, 0
          %s128 = scalar_select %p127, %s19, 0
          %s129 = smul.addr %s128, 54
          %s130 = smul.addr %s126, 54
          %s131 = sadd.s32 %s129, %s130
          %s132 = smul.addr %s131, 8
          %s133 = scalar_lea.vmem %s0, %s132
        $region24: #{tpu_custom_call.1} parent=19 // pred_fallthru
          _
      $region20: #{tpu_custom_call.1} parent=5 // pred_fallthru
        _
      %p134 = scmp.le.s32.totalorder 1, %s11
      %p135 = scmp.lt.s32.totalorder %s11, 3
      %p136 = pnand %p134, %p135
      %p137 = pneg %p136
      // Predicated region
      $region25: #{tpu_custom_call.1} parent=5 // pred_check
        _
      $region26: #{tpu_custom_call.1} parent=5 // pred_check_branch
        %139 = sbr.rel (%p136) target = $region28
      $region27: #{tpu_custom_call.1} parent=5 // pred_region
        %s140 = ssub.s32 %s11, 1
        %p141 = scmp.lt.s32.totalorder %s20, 1
        %s142 = scalar_select %p141, %s20, 1
        %p143 = scmp.lt.s32.totalorder %s21, 0
        %s144 = scalar_select %p143, %s21, 0
        %s145 = smul.addr %s144, 54
        %s146 = smul.addr %s142, 54
        %s147 = sadd.s32 %s145, %s146
        %s148 = smul.addr %s147, 8
        %s149 = scalar_lea.vmem %s0, %s148
        %p150 = pneg %p51
        %p151 = pneg %p48
        %p152 = pneg %p72
        %p153 = pneg %p69
        %p154 = pneg %p100
        %p155 = pneg %p97
        %s156 = sand.u32 %s87, 1
        %s157 = scalar_lea.sflag [#allocation3], %s156
        %s158 = sand.u32 %s87, 1
        %s159 = smul.addr %s158, 2
        %s160 = scalar_lea.vmem [#allocation2], %s159
        %p161 = scmp.lt.s32.totalorder %s20, 1
        %s162 = scalar_select %p161, %s20, 1
        %p163 = scmp.lt.s32.totalorder %s21, 0
        %s164 = scalar_select %p163, %s21, 0
        %s165 = smul.addr %s164, 54
        %s166 = smul.addr %s162, 54
        %s167 = sadd.s32 %s165, %s166
        %s168 = smul.addr %s167, 8
        %s169 = scalar_lea.vmem %s0, %s168
        %s170 = sadd.s32 %s20, %s21
        %v171 = vld [vmem:[%s169] sm:$0xff]
        %v172 = vld [vmem:[%s169 + $0x8] sm:$0xff]
        %v173 = vld [vmem:[%s169 + $0x10] sm:$0x3]
        %v174 = vld [vmem:[%s169 + $0x18] sm:$0xff]
        %v175 = vld [vmem:[%s169 + $0x20] sm:$0xff]
        %v176 = vld [vmem:[%s169 + $0x28] sm:$0x3]
        %v177 = vld [vmem:[%s169 + $0x30] sm:$0xff]
        %v178 = vld [vmem:[%s169 + $0x38] sm:$0xff]
        %v179 = vld [vmem:[%s169 + $0x40] sm:$0x3]
        %v180 = vld [vmem:[%s169 + $0x48] sm:$0xff]
        %v181 = vld [vmem:[%s169 + $0x50] sm:$0xff]
        %v182 = vld [vmem:[%s169 + $0x58] sm:$0x3]
        %v183 = vld [vmem:[%s169 + $0x60] sm:$0xff]
        %v184 = vld [vmem:[%s169 + $0x68] sm:$0xff]
        %v185 = vld [vmem:[%s169 + $0x70] sm:$0x3]
        %v186 = vld [vmem:[%s169 + $0x78] sm:$0xff]
        %v187 = vld [vmem:[%s169 + $0x80] sm:$0xff]
        %v188 = vld [vmem:[%s169 + $0x88] sm:$0x3]
        %v189 = vld [vmem:[%s169 + $0x90] sm:$0xff]
        %v190 = vld [vmem:[%s169 + $0x98] sm:$0xff]
        %v191 = vld [vmem:[%s169 + $0xa0] sm:$0x3]
        %v192 = vld [vmem:[%s169 + $0xa8] sm:$0xff]
        %v193 = vld [vmem:[%s169 + $0xb0] sm:$0xff]
        %v194 = vld [vmem:[%s169 + $0xb8] sm:$0x3]
        %v195 = vld [vmem:[%s169 + $0xc0] sm:$0xff]
        %v196 = vld [vmem:[%s169 + $0xc8] sm:$0xff]
        %v197 = vld [vmem:[%s169 + $0xd0] sm:$0x3]
        %v198 = vld [vmem:[%s169 + $0xd8] sm:$0xff]
        %v199 = vld [vmem:[%s169 + $0xe0] sm:$0xff]
        %v200 = vld [vmem:[%s169 + $0xe8] sm:$0x3]
        %v201 = vld [vmem:[%s169 + $0xf0] sm:$0xff]
        %v202 = vld [vmem:[%s169 + $0xf8] sm:$0xff]
        %v203 = vld [vmem:[%s169 + $0x100] sm:$0x3]
        %v204 = vld [vmem:[%s169 + $0x108] sm:$0xff]
        %v205 = vld [vmem:[%s169 + $0x110] sm:$0xff]
        %v206 = vld [vmem:[%s169 + $0x118] sm:$0x3]
        %v207 = vld [vmem:[%s169 + $0x120] sm:$0xff]
        %v208 = vld [vmem:[%s169 + $0x128] sm:$0xff]
        %v209 = vld [vmem:[%s169 + $0x130] sm:$0x3]
        %v210 = vld [vmem:[%s169 + $0x138] sm:$0xff]
        %v211 = vld [vmem:[%s169 + $0x140] sm:$0xff]
        %v212 = vld [vmem:[%s169 + $0x148] sm:$0x3]
        %v213 = vld [vmem:[%s169 + $0x150] sm:$0xff]
        %v214 = vld [vmem:[%s169 + $0x158] sm:$0xff]
        %v215 = vld [vmem:[%s169 + $0x160] sm:$0x3]
        %v216 = vld [vmem:[%s169 + $0x168] sm:$0xff]
        %v217 = vld [vmem:[%s169 + $0x170] sm:$0xff]
        %v218 = vld [vmem:[%s169 + $0x178] sm:$0x3]
        %s219 = scalar_lea.vmem %s169, 24
        %v220 = vld [vmem:[%s219] sm:$0xff]
        %v221 = vld [vmem:[%s219 + $0x8] sm:$0xff]
        %v222 = vld [vmem:[%s219 + $0x10] sm:$0x3]
        %v223 = vld [vmem:[%s219 + $0x18] sm:$0xff]
        %v224 = vld [vmem:[%s219 + $0x20] sm:$0xff]
        %v225 = vld [vmem:[%s219 + $0x28] sm:$0x3]
        %v226 = vld [vmem:[%s219 + $0x30] sm:$0xff]
        %v227 = vld [vmem:[%s219 + $0x38] sm:$0xff]
        %v228 = vld [vmem:[%s219 + $0x40] sm:$0x3]
        %v229 = vld [vmem:[%s219 + $0x48] sm:$0xff]
        %v230 = vld [vmem:[%s219 + $0x50] sm:$0xff]
        %v231 = vld [vmem:[%s219 + $0x58] sm:$0x3]
        %v232 = vld [vmem:[%s219 + $0x60] sm:$0xff]
        %v233 = vld [vmem:[%s219 + $0x68] sm:$0xff]
        %v234 = vld [vmem:[%s219 + $0x70] sm:$0x3]
        %v235 = vld [vmem:[%s219 + $0x78] sm:$0xff]
        %v236 = vld [vmem:[%s219 + $0x80] sm:$0xff]
        %v237 = vld [vmem:[%s219 + $0x88] sm:$0x3]
        %v238 = vld [vmem:[%s219 + $0x90] sm:$0xff]
        %v239 = vld [vmem:[%s219 + $0x98] sm:$0xff]
        %v240 = vld [vmem:[%s219 + $0xa0] sm:$0x3]
        %v241 = vld [vmem:[%s219 + $0xa8] sm:$0xff]
        %v242 = vld [vmem:[%s219 + $0xb0] sm:$0xff]
        %v243 = vld [vmem:[%s219 + $0xb8] sm:$0x3]
        %v244 = vld [vmem:[%s219 + $0xc0] sm:$0xff]
        %v245 = vld [vmem:[%s219 + $0xc8] sm:$0xff]
        %v246 = vld [vmem:[%s219 + $0xd0] sm:$0x3]
        %v247 = vld [vmem:[%s219 + $0xd8] sm:$0xff]
        %v248 = vld [vmem:[%s219 + $0xe0] sm:$0xff]
        %v249 = vld [vmem:[%s219 + $0xe8] sm:$0x3]
        %v250 = vld [vmem:[%s219 + $0xf0] sm:$0xff]
        %v251 = vld [vmem:[%s219 + $0xf8] sm:$0xff]
        %v252 = vld [vmem:[%s219 + $0x100] sm:$0x3]
        %v253 = vld [vmem:[%s219 + $0x108] sm:$0xff]
        %v254 = vld [vmem:[%s219 + $0x110] sm:$0xff]
        %v255 = vld [vmem:[%s219 + $0x118] sm:$0x3]
        %v256 = vld [vmem:[%s219 + $0x120] sm:$0xff]
        %v257 = vld [vmem:[%s219 + $0x128] sm:$0xff]
        %v258 = vld [vmem:[%s219 + $0x130] sm:$0x3]
        %v259 = vld [vmem:[%s219 + $0x138] sm:$0xff]
        %v260 = vld [vmem:[%s219 + $0x140] sm:$0xff]
        %v261 = vld [vmem:[%s219 + $0x148] sm:$0x3]
        %v262 = vld [vmem:[%s219 + $0x150] sm:$0xff]
        %v263 = vld [vmem:[%s219 + $0x158] sm:$0xff]
        %v264 = vld [vmem:[%s219 + $0x160] sm:$0x3]
        %v265 = vld [vmem:[%s219 + $0x168] sm:$0xff]
        %v266 = vld [vmem:[%s219 + $0x170] sm:$0xff]
        %v267 = vld [vmem:[%s219 + $0x178] sm:$0x3]
        %s268 = scalar_lea.vmem %s169, 48
        %v269 = vld [vmem:[%s268] sm:$0xff]
        %v270 = vld [vmem:[%s268 + $0x8] sm:$0xff]
        %v271 = vld [vmem:[%s268 + $0x10] sm:$0x3]
        %v272 = vld [vmem:[%s268 + $0x18] sm:$0xff]
        %v273 = vld [vmem:[%s268 + $0x20] sm:$0xff]
        %v274 = vld [vmem:[%s268 + $0x28] sm:$0x3]
        %v275 = vld [vmem:[%s268 + $0x30] sm:$0xff]
        %v276 = vld [vmem:[%s268 + $0x38] sm:$0xff]
        %v277 = vld [vmem:[%s268 + $0x40] sm:$0x3]
        %v278 = vld [vmem:[%s268 + $0x48] sm:$0xff]
        %v279 = vld [vmem:[%s268 + $0x50] sm:$0xff]
        %v280 = vld [vmem:[%s268 + $0x58] sm:$0x3]
        %v281 = vld [vmem:[%s268 + $0x60] sm:$0xff]
        %v282 = vld [vmem:[%s268 + $0x68] sm:$0xff]
        %v283 = vld [vmem:[%s268 + $0x70] sm:$0x3]
        %v284 = vld [vmem:[%s268 + $0x78] sm:$0xff]
        %v285 = vld [vmem:[%s268 + $0x80] sm:$0xff]
        %v286 = vld [vmem:[%s268 + $0x88] sm:$0x3]
        %v287 = vld [vmem:[%s268 + $0x90] sm:$0xff]
        %v288 = vld [vmem:[%s268 + $0x98] sm:$0xff]
        %v289 = vld [vmem:[%s268 + $0xa0] sm:$0x3]
        %v290 = vld [vmem:[%s268 + $0xa8] sm:$0xff]
        %v291 = vld [vmem:[%s268 + $0xb0] sm:$0xff]
        %v292 = vld [vmem:[%s268 + $0xb8] sm:$0x3]
        %v293 = vld [vmem:[%s268 + $0xc0] sm:$0xff]
        %v294 = vld [vmem:[%s268 + $0xc8] sm:$0xff]
        %v295 = vld [vmem:[%s268 + $0xd0] sm:$0x3]
        %v296 = vld [vmem:[%s268 + $0xd8] sm:$0xff]
        %v297 = vld [vmem:[%s268 + $0xe0] sm:$0xff]
        %v298 = vld [vmem:[%s268 + $0xe8] sm:$0x3]
        %v299 = vld [vmem:[%s268 + $0xf0] sm:$0xff]
        %v300 = vld [vmem:[%s268 + $0xf8] sm:$0xff]
        %v301 = vld [vmem:[%s268 + $0x100] sm:$0x3]
        %v302 = vld [vmem:[%s268 + $0x108] sm:$0xff]
        %v303 = vld [vmem:[%s268 + $0x110] sm:$0xff]
        %v304 = vld [vmem:[%s268 + $0x118] sm:$0x3]
        %v305 = vld [vmem:[%s268 + $0x120] sm:$0xff]
        %v306 = vld [vmem:[%s268 + $0x128] sm:$0xff]
        %v307 = vld [vmem:[%s268 + $0x130] sm:$0x3]
        %v308 = vld [vmem:[%s268 + $0x138] sm:$0xff]
        %v309 = vld [vmem:[%s268 + $0x140] sm:$0xff]
        %v310 = vld [vmem:[%s268 + $0x148] sm:$0x3]
        %v311 = vld [vmem:[%s268 + $0x150] sm:$0xff]
        %v312 = vld [vmem:[%s268 + $0x158] sm:$0xff]
        %v313 = vld [vmem:[%s268 + $0x160] sm:$0x3]
        %v314 = vld [vmem:[%s268 + $0x168] sm:$0xff]
        %v315 = vld [vmem:[%s268 + $0x170] sm:$0xff]
        %v316 = vld [vmem:[%s268 + $0x178] sm:$0x3]
        %vm365 = vcmask 1046528
        %v366 = vrot.slane %v171, 1
        %v367 = vrot.slane %v172, 1
        %v368 = vsel %vm365, %v366, %v367
        %v369 = vrot.slane %v173, 1
        %v370 = vsel %vm365, %v367, %v369
        %v371 = vrot.slane %v174, 1
        %v372 = vrot.slane %v175, 1
        %v373 = vsel %vm365, %v371, %v372
        %v374 = vrot.slane %v176, 1
        %v375 = vsel %vm365, %v372, %v374
        %v376 = vrot.slane %v177, 1
        %v377 = vrot.slane %v178, 1
        %v378 = vsel %vm365, %v376, %v377
        %v379 = vrot.slane %v179, 1
        %v380 = vsel %vm365, %v377, %v379
        %v381 = vrot.slane %v180, 1
        %v382 = vrot.slane %v181, 1
        %v383 = vsel %vm365, %v381, %v382
        %v384 = vrot.slane %v182, 1
        %v385 = vsel %vm365, %v382, %v384
        %v386 = vrot.slane %v183, 1
        %v387 = vrot.slane %v184, 1
        %v388 = vsel %vm365, %v386, %v387
        %v389 = vrot.slane %v185, 1
        %v390 = vsel %vm365, %v387, %v389
        %v391 = vrot.slane %v186, 1
        %v392 = vrot.slane %v187, 1
        %v393 = vsel %vm365, %v391, %v392
        %v394 = vrot.slane %v188, 1
        %v395 = vsel %vm365, %v392, %v394
        %v396 = vrot.slane %v189, 1
        %v397 = vrot.slane %v190, 1
        %v398 = vsel %vm365, %v396, %v397
        %v399 = vrot.slane %v191, 1
        %v400 = vsel %vm365, %v397, %v399
        %v401 = vrot.slane %v192, 1
        %v402 = vrot.slane %v193, 1
        %v403 = vsel %vm365, %v401, %v402
        %v404 = vrot.slane %v194, 1
        %v405 = vsel %vm365, %v402, %v404
        %v406 = vrot.slane %v195, 1
        %v407 = vrot.slane %v196, 1
        %v408 = vsel %vm365, %v406, %v407
        %v409 = vrot.slane %v197, 1
        %v410 = vsel %vm365, %v407, %v409
        %v411 = vrot.slane %v198, 1
        %v412 = vrot.slane %v199, 1
        %v413 = vsel %vm365, %v411, %v412
        %v414 = vrot.slane %v200, 1
        %v415 = vsel %vm365, %v412, %v414
        %v416 = vrot.slane %v201, 1
        %v417 = vrot.slane %v202, 1
        %v418 = vsel %vm365, %v416, %v417
        %v419 = vrot.slane %v203, 1
        %v420 = vsel %vm365, %v417, %v419
        %v421 = vrot.slane %v204, 1
        %v422 = vrot.slane %v205, 1
        %v423 = vsel %vm365, %v421, %v422
        %v424 = vrot.slane %v206, 1
        %v425 = vsel %vm365, %v422, %v424
        %v426 = vrot.slane %v207, 1
        %v427 = vrot.slane %v208, 1
        %v428 = vsel %vm365, %v426, %v427
        %v429 = vrot.slane %v209, 1
        %v430 = vsel %vm365, %v427, %v429
        %v431 = vrot.slane %v210, 1
        %v432 = vrot.slane %v211, 1
        %v433 = vsel %vm365, %v431, %v432
        %v434 = vrot.slane %v212, 1
        %v435 = vsel %vm365, %v432, %v434
        %v436 = vrot.slane %v213, 1
        %v437 = vrot.slane %v214, 1
        %v438 = vsel %vm365, %v436, %v437
        %v439 = vrot.slane %v215, 1
        %v440 = vsel %vm365, %v437, %v439
        %v441 = vrot.slane %v216, 1
        %v442 = vrot.slane %v217, 1
        %v443 = vsel %vm365, %v441, %v442
        %v444 = vrot.slane %v218, 1
        %v445 = vsel %vm365, %v442, %v444
        %446 = vrot.lane.b32.xlu0 %v368, 4
        %v447 = vpop.permute.xlu0 %446
        %448 = vrot.lane.b32.xlu0 %v370, 4
        %v449 = vpop.permute.xlu0 %448
        %450 = vrot.lane.b32.xlu0 %v373, 4
        %v451 = vpop.permute.xlu0 %450
        %452 = vrot.lane.b32.xlu0 %v375, 4
        %v453 = vpop.permute.xlu0 %452
        %454 = vrot.lane.b32.xlu0 %v378, 4
        %v455 = vpop.permute.xlu0 %454
        %456 = vrot.lane.b32.xlu0 %v380, 4
        %v457 = vpop.permute.xlu0 %456
        %458 = vrot.lane.b32.xlu0 %v383, 4
        %v459 = vpop.permute.xlu0 %458
        %460 = vrot.lane.b32.xlu0 %v385, 4
        %v461 = vpop.permute.xlu0 %460
        %462 = vrot.lane.b32.xlu0 %v388, 4
        %v463 = vpop.permute.xlu0 %462
        %464 = vrot.lane.b32.xlu0 %v390, 4
        %v465 = vpop.permute.xlu0 %464
        %466 = vrot.lane.b32.xlu0 %v393, 4
        %v467 = vpop.permute.xlu0 %466
        %468 = vrot.lane.b32.xlu0 %v395, 4
        %v469 = vpop.permute.xlu0 %468
        %470 = vrot.lane.b32.xlu0 %v398, 4
        %v471 = vpop.permute.xlu0 %470
        %472 = vrot.lane.b32.xlu0 %v400, 4
        %v473 = vpop.permute.xlu0 %472
        %474 = vrot.lane.b32.xlu0 %v403, 4
        %v475 = vpop.permute.xlu0 %474
        %476 = vrot.lane.b32.xlu0 %v405, 4
        %v477 = vpop.permute.xlu0 %476
        %478 = vrot.lane.b32.xlu0 %v408, 4
        %v479 = vpop.permute.xlu0 %478
        %480 = vrot.lane.b32.xlu0 %v410, 4
        %v481 = vpop.permute.xlu0 %480
        %482 = vrot.lane.b32.xlu0 %v413, 4
        %v483 = vpop.permute.xlu0 %482
        %484 = vrot.lane.b32.xlu0 %v415, 4
        %v485 = vpop.permute.xlu0 %484
        %486 = vrot.lane.b32.xlu0 %v418, 4
        %v487 = vpop.permute.xlu0 %486
        %488 = vrot.lane.b32.xlu0 %v420, 4
        %v489 = vpop.permute.xlu0 %488
        %490 = vrot.lane.b32.xlu0 %v423, 4
        %v491 = vpop.permute.xlu0 %490
        %492 = vrot.lane.b32.xlu0 %v425, 4
        %v493 = vpop.permute.xlu0 %492
        %494 = vrot.lane.b32.xlu0 %v428, 4
        %v495 = vpop.permute.xlu0 %494
        %496 = vrot.lane.b32.xlu0 %v430, 4
        %v497 = vpop.permute.xlu0 %496
        %498 = vrot.lane.b32.xlu0 %v433, 4
        %v499 = vpop.permute.xlu0 %498
        %500 = vrot.lane.b32.xlu0 %v435, 4
        %v501 = vpop.permute.xlu0 %500
        %502 = vrot.lane.b32.xlu0 %v438, 4
        %v503 = vpop.permute.xlu0 %502
        %504 = vrot.lane.b32.xlu0 %v440, 4
        %v505 = vpop.permute.xlu0 %504
        %506 = vrot.lane.b32.xlu0 %v443, 4
        %v507 = vpop.permute.xlu0 %506
        %508 = vrot.lane.b32.xlu0 %v445, 4
        %v509 = vpop.permute.xlu0 %508
        %vm542 = vcmask 1045504
        %v543 = vrot.slane %v171, 2
        %v544 = vrot.slane %v172, 2
        %v545 = vsel %vm542, %v543, %v544
        %v546 = vrot.slane %v173, 2
        %v547 = vsel %vm542, %v544, %v546
        %v548 = vrot.slane %v174, 2
        %v549 = vrot.slane %v175, 2
        %v550 = vsel %vm542, %v548, %v549
        %v551 = vrot.slane %v176, 2
        %v552 = vsel %vm542, %v549, %v551
        %v553 = vrot.slane %v177, 2
        %v554 = vrot.slane %v178, 2
        %v555 = vsel %vm542, %v553, %v554
        %v556 = vrot.slane %v179, 2
        %v557 = vsel %vm542, %v554, %v556
        %v558 = vrot.slane %v180, 2
        %v559 = vrot.slane %v181, 2
        %v560 = vsel %vm542, %v558, %v559
        %v561 = vrot.slane %v182, 2
        %v562 = vsel %vm542, %v559, %v561
        %v563 = vrot.slane %v183, 2
        %v564 = vrot.slane %v184, 2
        %v565 = vsel %vm542, %v563, %v564
        %v566 = vrot.slane %v185, 2
        %v567 = vsel %vm542, %v564, %v566
        %v568 = vrot.slane %v186, 2
        %v569 = vrot.slane %v187, 2
        %v570 = vsel %vm542, %v568, %v569
        %v571 = vrot.slane %v188, 2
        %v572 = vsel %vm542, %v569, %v571
        %v573 = vrot.slane %v189, 2
        %v574 = vrot.slane %v190, 2
        %v575 = vsel %vm542, %v573, %v574
        %v576 = vrot.slane %v191, 2
        %v577 = vsel %vm542, %v574, %v576
        %v578 = vrot.slane %v192, 2
        %v579 = vrot.slane %v193, 2
        %v580 = vsel %vm542, %v578, %v579
        %v581 = vrot.slane %v194, 2
        %v582 = vsel %vm542, %v579, %v581
        %v583 = vrot.slane %v195, 2
        %v584 = vrot.slane %v196, 2
        %v585 = vsel %vm542, %v583, %v584
        %v586 = vrot.slane %v197, 2
        %v587 = vsel %vm542, %v584, %v586
        %v588 = vrot.slane %v198, 2
        %v589 = vrot.slane %v199, 2
        %v590 = vsel %vm542, %v588, %v589
        %v591 = vrot.slane %v200, 2
        %v592 = vsel %vm542, %v589, %v591
        %v593 = vrot.slane %v201, 2
        %v594 = vrot.slane %v202, 2
        %v595 = vsel %vm542, %v593, %v594
        %v596 = vrot.slane %v203, 2
        %v597 = vsel %vm542, %v594, %v596
        %v598 = vrot.slane %v204, 2
        %v599 = vrot.slane %v205, 2
        %v600 = vsel %vm542, %v598, %v599
        %v601 = vrot.slane %v206, 2
        %v602 = vsel %vm542, %v599, %v601
        %v603 = vrot.slane %v207, 2
        %v604 = vrot.slane %v208, 2
        %v605 = vsel %vm542, %v603, %v604
        %v606 = vrot.slane %v209, 2
        %v607 = vsel %vm542, %v604, %v606
        %v608 = vrot.slane %v210, 2
        %v609 = vrot.slane %v211, 2
        %v610 = vsel %vm542, %v608, %v609
        %v611 = vrot.slane %v212, 2
        %v612 = vsel %vm542, %v609, %v611
        %v613 = vrot.slane %v213, 2
        %v614 = vrot.slane %v214, 2
        %v615 = vsel %vm542, %v613, %v614
        %v616 = vrot.slane %v215, 2
        %v617 = vsel %vm542, %v614, %v616
        %v618 = vrot.slane %v216, 2
        %v619 = vrot.slane %v217, 2
        %v620 = vsel %vm542, %v618, %v619
        %v621 = vrot.slane %v218, 2
        %v622 = vsel %vm542, %v619, %v621
        %623 = vrot.lane.b32.xlu0 %v545, 8
        %v624 = vpop.permute.xlu0 %623
        %625 = vrot.lane.b32.xlu0 %v547, 8
        %v626 = vpop.permute.xlu0 %625
        %627 = vrot.lane.b32.xlu0 %v550, 8
        %v628 = vpop.permute.xlu0 %627
        %629 = vrot.lane.b32.xlu0 %v552, 8
        %v630 = vpop.permute.xlu0 %629
        %631 = vrot.lane.b32.xlu0 %v555, 8
        %v632 = vpop.permute.xlu0 %631
        %633 = vrot.lane.b32.xlu0 %v557, 8
        %v634 = vpop.permute.xlu0 %633
        %635 = vrot.lane.b32.xlu0 %v560, 8
        %v636 = vpop.permute.xlu0 %635
        %637 = vrot.lane.b32.xlu0 %v562, 8
        %v638 = vpop.permute.xlu0 %637
        %639 = vrot.lane.b32.xlu0 %v565, 8
        %v640 = vpop.permute.xlu0 %639
        %641 = vrot.lane.b32.xlu0 %v567, 8
        %v642 = vpop.permute.xlu0 %641
        %643 = vrot.lane.b32.xlu0 %v570, 8
        %v644 = vpop.permute.xlu0 %643
        %645 = vrot.lane.b32.xlu0 %v572, 8
        %v646 = vpop.permute.xlu0 %645
        %647 = vrot.lane.b32.xlu0 %v575, 8
        %v648 = vpop.permute.xlu0 %647
        %649 = vrot.lane.b32.xlu0 %v577, 8
        %v650 = vpop.permute.xlu0 %649
        %651 = vrot.lane.b32.xlu0 %v580, 8
        %v652 = vpop.permute.xlu0 %651
        %653 = vrot.lane.b32.xlu0 %v582, 8
        %v654 = vpop.permute.xlu0 %653
        %655 = vrot.lane.b32.xlu0 %v585, 8
        %v656 = vpop.permute.xlu0 %655
        %657 = vrot.lane.b32.xlu0 %v587, 8
        %v658 = vpop.permute.xlu0 %657
        %659 = vrot.lane.b32.xlu0 %v590, 8
        %v660 = vpop.permute.xlu0 %659
        %661 = vrot.lane.b32.xlu0 %v592, 8
        %v662 = vpop.permute.xlu0 %661
        %663 = vrot.lane.b32.xlu0 %v595, 8
        %v664 = vpop.permute.xlu0 %663
        %665 = vrot.lane.b32.xlu0 %v597, 8
        %v666 = vpop.permute.xlu0 %665
        %667 = vrot.lane.b32.xlu0 %v600, 8
        %v668 = vpop.permute.xlu0 %667
        %669 = vrot.lane.b32.xlu0 %v602, 8
        %v670 = vpop.permute.xlu0 %669
        %671 = vrot.lane.b32.xlu0 %v605, 8
        %v672 = vpop.permute.xlu0 %671
        %673 = vrot.lane.b32.xlu0 %v607, 8
        %v674 = vpop.permute.xlu0 %673
        %675 = vrot.lane.b32.xlu0 %v610, 8
        %v676 = vpop.permute.xlu0 %675
        %677 = vrot.lane.b32.xlu0 %v612, 8
        %v678 = vpop.permute.xlu0 %677
        %679 = vrot.lane.b32.xlu0 %v615, 8
        %v680 = vpop.permute.xlu0 %679
        %681 = vrot.lane.b32.xlu0 %v617, 8
        %v682 = vpop.permute.xlu0 %681
        %683 = vrot.lane.b32.xlu0 %v620, 8
        %v684 = vpop.permute.xlu0 %683
        %685 = vrot.lane.b32.xlu0 %v622, 8
        %v686 = vpop.permute.xlu0 %685
        %751 = vrot.lane.b32.xlu0 %v220, 12
        %v752 = vpop.permute.xlu0 %751
        %753 = vrot.lane.b32.xlu0 %v221, 12
        %v754 = vpop.permute.xlu0 %753
        %755 = vrot.lane.b32.xlu0 %v223, 12
        %v756 = vpop.permute.xlu0 %755
        %757 = vrot.lane.b32.xlu0 %v224, 12
        %v758 = vpop.permute.xlu0 %757
        %759 = vrot.lane.b32.xlu0 %v226, 12
        %v760 = vpop.permute.xlu0 %759
        %761 = vrot.lane.b32.xlu0 %v227, 12
        %v762 = vpop.permute.xlu0 %761
        %763 = vrot.lane.b32.xlu0 %v229, 12
        %v764 = vpop.permute.xlu0 %763
        %765 = vrot.lane.b32.xlu0 %v230, 12
        %v766 = vpop.permute.xlu0 %765
        %767 = vrot.lane.b32.xlu0 %v232, 12
        %v768 = vpop.permute.xlu0 %767
        %769 = vrot.lane.b32.xlu0 %v233, 12
        %v770 = vpop.permute.xlu0 %769
        %771 = vrot.lane.b32.xlu0 %v235, 12
        %v772 = vpop.permute.xlu0 %771
        %773 = vrot.lane.b32.xlu0 %v236, 12
        %v774 = vpop.permute.xlu0 %773
        %775 = vrot.lane.b32.xlu0 %v238, 12
        %v776 = vpop.permute.xlu0 %775
        %777 = vrot.lane.b32.xlu0 %v239, 12
        %v778 = vpop.permute.xlu0 %777
        %779 = vrot.lane.b32.xlu0 %v241, 12
        %v780 = vpop.permute.xlu0 %779
        %781 = vrot.lane.b32.xlu0 %v242, 12
        %v782 = vpop.permute.xlu0 %781
        %783 = vrot.lane.b32.xlu0 %v244, 12
        %v784 = vpop.permute.xlu0 %783
        %785 = vrot.lane.b32.xlu0 %v245, 12
        %v786 = vpop.permute.xlu0 %785
        %787 = vrot.lane.b32.xlu0 %v247, 12
        %v788 = vpop.permute.xlu0 %787
        %789 = vrot.lane.b32.xlu0 %v248, 12
        %v790 = vpop.permute.xlu0 %789
        %791 = vrot.lane.b32.xlu0 %v250, 12
        %v792 = vpop.permute.xlu0 %791
        %793 = vrot.lane.b32.xlu0 %v251, 12
        %v794 = vpop.permute.xlu0 %793
        %795 = vrot.lane.b32.xlu0 %v253, 12
        %v796 = vpop.permute.xlu0 %795
        %797 = vrot.lane.b32.xlu0 %v254, 12
        %v798 = vpop.permute.xlu0 %797
        %799 = vrot.lane.b32.xlu0 %v256, 12
        %v800 = vpop.permute.xlu0 %799
        %801 = vrot.lane.b32.xlu0 %v257, 12
        %v802 = vpop.permute.xlu0 %801
        %803 = vrot.lane.b32.xlu0 %v259, 12
        %v804 = vpop.permute.xlu0 %803
        %805 = vrot.lane.b32.xlu0 %v260, 12
        %v806 = vpop.permute.xlu0 %805
        %807 = vrot.lane.b32.xlu0 %v262, 12
        %v808 = vpop.permute.xlu0 %807
        %809 = vrot.lane.b32.xlu0 %v263, 12
        %v810 = vpop.permute.xlu0 %809
        %811 = vrot.lane.b32.xlu0 %v265, 12
        %v812 = vpop.permute.xlu0 %811
        %813 = vrot.lane.b32.xlu0 %v266, 12
        %v814 = vpop.permute.xlu0 %813
        %v863 = vrot.slane %v220, 1
        %v864 = vrot.slane %v221, 1
        %v865 = vsel %vm365, %v863, %v864
        %v866 = vrot.slane %v222, 1
        %v867 = vsel %vm365, %v864, %v866
        %v868 = vrot.slane %v223, 1
        %v869 = vrot.slane %v224, 1
        %v870 = vsel %vm365, %v868, %v869
        %v871 = vrot.slane %v225, 1
        %v872 = vsel %vm365, %v869, %v871
        %v873 = vrot.slane %v226, 1
        %v874 = vrot.slane %v227, 1
        %v875 = vsel %vm365, %v873, %v874
        %v876 = vrot.slane %v228, 1
        %v877 = vsel %vm365, %v874, %v876
        %v878 = vrot.slane %v229, 1
        %v879 = vrot.slane %v230, 1
        %v880 = vsel %vm365, %v878, %v879
        %v881 = vrot.slane %v231, 1
        %v882 = vsel %vm365, %v879, %v881
        %v883 = vrot.slane %v232, 1
        %v884 = vrot.slane %v233, 1
        %v885 = vsel %vm365, %v883, %v884
        %v886 = vrot.slane %v234, 1
        %v887 = vsel %vm365, %v884, %v886
        %v888 = vrot.slane %v235, 1
        %v889 = vrot.slane %v236, 1
        %v890 = vsel %vm365, %v888, %v889
        %v891 = vrot.slane %v237, 1
        %v892 = vsel %vm365, %v889, %v891
        %v893 = vrot.slane %v238, 1
        %v894 = vrot.slane %v239, 1
        %v895 = vsel %vm365, %v893, %v894
        %v896 = vrot.slane %v240, 1
        %v897 = vsel %vm365, %v894, %v896
        %v898 = vrot.slane %v241, 1
        %v899 = vrot.slane %v242, 1
        %v900 = vsel %vm365, %v898, %v899
        %v901 = vrot.slane %v243, 1
        %v902 = vsel %vm365, %v899, %v901
        %v903 = vrot.slane %v244, 1
        %v904 = vrot.slane %v245, 1
        %v905 = vsel %vm365, %v903, %v904
        %v906 = vrot.slane %v246, 1
        %v907 = vsel %vm365, %v904, %v906
        %v908 = vrot.slane %v247, 1
        %v909 = vrot.slane %v248, 1
        %v910 = vsel %vm365, %v908, %v909
        %v911 = vrot.slane %v249, 1
        %v912 = vsel %vm365, %v909, %v911
        %v913 = vrot.slane %v250, 1
        %v914 = vrot.slane %v251, 1
        %v915 = vsel %vm365, %v913, %v914
        %v916 = vrot.slane %v252, 1
        %v917 = vsel %vm365, %v914, %v916
        %v918 = vrot.slane %v253, 1
        %v919 = vrot.slane %v254, 1
        %v920 = vsel %vm365, %v918, %v919
        %v921 = vrot.slane %v255, 1
        %v922 = vsel %vm365, %v919, %v921
        %v923 = vrot.slane %v256, 1
        %v924 = vrot.slane %v257, 1
        %v925 = vsel %vm365, %v923, %v924
        %v926 = vrot.slane %v258, 1
        %v927 = vsel %vm365, %v924, %v926
        %v928 = vrot.slane %v259, 1
        %v929 = vrot.slane %v260, 1
        %v930 = vsel %vm365, %v928, %v929
        %v931 = vrot.slane %v261, 1
        %v932 = vsel %vm365, %v929, %v931
        %v933 = vrot.slane %v262, 1
        %v934 = vrot.slane %v263, 1
        %v935 = vsel %vm365, %v933, %v934
        %v936 = vrot.slane %v264, 1
        %v937 = vsel %vm365, %v934, %v936
        %v938 = vrot.slane %v265, 1
        %v939 = vrot.slane %v266, 1
        %v940 = vsel %vm365, %v938, %v939
        %v941 = vrot.slane %v267, 1
        %v942 = vsel %vm365, %v939, %v941
        %943 = vrot.lane.b32.xlu0 %v865, 16
        %v944 = vpop.permute.xlu0 %943
        %945 = vrot.lane.b32.xlu0 %v867, 16
        %v946 = vpop.permute.xlu0 %945
        %947 = vrot.lane.b32.xlu0 %v870, 16
        %v948 = vpop.permute.xlu0 %947
        %949 = vrot.lane.b32.xlu0 %v872, 16
        %v950 = vpop.permute.xlu0 %949
        %951 = vrot.lane.b32.xlu0 %v875, 16
        %v952 = vpop.permute.xlu0 %951
        %953 = vrot.lane.b32.xlu0 %v877, 16
        %v954 = vpop.permute.xlu0 %953
        %955 = vrot.lane.b32.xlu0 %v880, 16
        %v956 = vpop.permute.xlu0 %955
        %957 = vrot.lane.b32.xlu0 %v882, 16
        %v958 = vpop.permute.xlu0 %957
        %959 = vrot.lane.b32.xlu0 %v885, 16
        %v960 = vpop.permute.xlu0 %959
        %961 = vrot.lane.b32.xlu0 %v887, 16
        %v962 = vpop.permute.xlu0 %961
        %963 = vrot.lane.b32.xlu0 %v890, 16
        %v964 = vpop.permute.xlu0 %963
        %965 = vrot.lane.b32.xlu0 %v892, 16
        %v966 = vpop.permute.xlu0 %965
        %967 = vrot.lane.b32.xlu0 %v895, 16
        %v968 = vpop.permute.xlu0 %967
        %969 = vrot.lane.b32.xlu0 %v897, 16
        %v970 = vpop.permute.xlu0 %969
        %971 = vrot.lane.b32.xlu0 %v900, 16
        %v972 = vpop.permute.xlu0 %971
        %973 = vrot.lane.b32.xlu0 %v902, 16
        %v974 = vpop.permute.xlu0 %973
        %975 = vrot.lane.b32.xlu0 %v905, 16
        %v976 = vpop.permute.xlu0 %975
        %977 = vrot.lane.b32.xlu0 %v907, 16
        %v978 = vpop.permute.xlu0 %977
        %979 = vrot.lane.b32.xlu0 %v910, 16
        %v980 = vpop.permute.xlu0 %979
        %981 = vrot.lane.b32.xlu0 %v912, 16
        %v982 = vpop.permute.xlu0 %981
        %983 = vrot.lane.b32.xlu0 %v915, 16
        %v984 = vpop.permute.xlu0 %983
        %985 = vrot.lane.b32.xlu0 %v917, 16
        %v986 = vpop.permute.xlu0 %985
        %987 = vrot.lane.b32.xlu0 %v920, 16
        %v988 = vpop.permute.xlu0 %987
        %989 = vrot.lane.b32.xlu0 %v922, 16
        %v990 = vpop.permute.xlu0 %989
        %991 = vrot.lane.b32.xlu0 %v925, 16
        %v992 = vpop.permute.xlu0 %991
        %993 = vrot.lane.b32.xlu0 %v927, 16
        %v994 = vpop.permute.xlu0 %993
        %995 = vrot.lane.b32.xlu0 %v930, 16
        %v996 = vpop.permute.xlu0 %995
        %997 = vrot.lane.b32.xlu0 %v932, 16
        %v998 = vpop.permute.xlu0 %997
        %999 = vrot.lane.b32.xlu0 %v935, 16
        %v1000 = vpop.permute.xlu0 %999
        %1001 = vrot.lane.b32.xlu0 %v937, 16
        %v1002 = vpop.permute.xlu0 %1001
        %1003 = vrot.lane.b32.xlu0 %v940, 16
        %v1004 = vpop.permute.xlu0 %1003
        %1005 = vrot.lane.b32.xlu0 %v942, 16
        %v1006 = vpop.permute.xlu0 %1005
        %v1039 = vrot.slane %v220, 2
        %v1040 = vrot.slane %v221, 2
        %v1041 = vsel %vm542, %v1039, %v1040
        %v1042 = vrot.slane %v222, 2
        %v1043 = vsel %vm542, %v1040, %v1042
        %v1044 = vrot.slane %v223, 2
        %v1045 = vrot.slane %v224, 2
        %v1046 = vsel %vm542, %v1044, %v1045
        %v1047 = vrot.slane %v225, 2
        %v1048 = vsel %vm542, %v1045, %v1047
        %v1049 = vrot.slane %v226, 2
        %v1050 = vrot.slane %v227, 2
        %v1051 = vsel %vm542, %v1049, %v1050
        %v1052 = vrot.slane %v228, 2
        %v1053 = vsel %vm542, %v1050, %v1052
        %v1054 = vrot.slane %v229, 2
        %v1055 = vrot.slane %v230, 2
        %v1056 = vsel %vm542, %v1054, %v1055
        %v1057 = vrot.slane %v231, 2
        %v1058 = vsel %vm542, %v1055, %v1057
        %v1059 = vrot.slane %v232, 2
        %v1060 = vrot.slane %v233, 2
        %v1061 = vsel %vm542, %v1059, %v1060
        %v1062 = vrot.slane %v234, 2
        %v1063 = vsel %vm542, %v1060, %v1062
        %v1064 = vrot.slane %v235, 2
        %v1065 = vrot.slane %v236, 2
        %v1066 = vsel %vm542, %v1064, %v1065
        %v1067 = vrot.slane %v237, 2
        %v1068 = vsel %vm542, %v1065, %v1067
        %v1069 = vrot.slane %v238, 2
        %v1070 = vrot.slane %v239, 2
        %v1071 = vsel %vm542, %v1069, %v1070
        %v1072 = vrot.slane %v240, 2
        %v1073 = vsel %vm542, %v1070, %v1072
        %v1074 = vrot.slane %v241, 2
        %v1075 = vrot.slane %v242, 2
        %v1076 = vsel %vm542, %v1074, %v1075
        %v1077 = vrot.slane %v243, 2
        %v1078 = vsel %vm542, %v1075, %v1077
        %v1079 = vrot.slane %v244, 2
        %v1080 = vrot.slane %v245, 2
        %v1081 = vsel %vm542, %v1079, %v1080
        %v1082 = vrot.slane %v246, 2
        %v1083 = vsel %vm542, %v1080, %v1082
        %v1084 = vrot.slane %v247, 2
        %v1085 = vrot.slane %v248, 2
        %v1086 = vsel %vm542, %v1084, %v1085
        %v1087 = vrot.slane %v249, 2
        %v1088 = vsel %vm542, %v1085, %v1087
        %v1089 = vrot.slane %v250, 2
        %v1090 = vrot.slane %v251, 2
        %v1091 = vsel %vm542, %v1089, %v1090
        %v1092 = vrot.slane %v252, 2
        %v1093 = vsel %vm542, %v1090, %v1092
        %v1094 = vrot.slane %v253, 2
        %v1095 = vrot.slane %v254, 2
        %v1096 = vsel %vm542, %v1094, %v1095
        %v1097 = vrot.slane %v255, 2
        %v1098 = vsel %vm542, %v1095, %v1097
        %v1099 = vrot.slane %v256, 2
        %v1100 = vrot.slane %v257, 2
        %v1101 = vsel %vm542, %v1099, %v1100
        %v1102 = vrot.slane %v258, 2
        %v1103 = vsel %vm542, %v1100, %v1102
        %v1104 = vrot.slane %v259, 2
        %v1105 = vrot.slane %v260, 2
        %v1106 = vsel %vm542, %v1104, %v1105
        %v1107 = vrot.slane %v261, 2
        %v1108 = vsel %vm542, %v1105, %v1107
        %v1109 = vrot.slane %v262, 2
        %v1110 = vrot.slane %v263, 2
        %v1111 = vsel %vm542, %v1109, %v1110
        %v1112 = vrot.slane %v264, 2
        %v1113 = vsel %vm542, %v1110, %v1112
        %v1114 = vrot.slane %v265, 2
        %v1115 = vrot.slane %v266, 2
        %v1116 = vsel %vm542, %v1114, %v1115
        %v1117 = vrot.slane %v267, 2
        %v1118 = vsel %vm542, %v1115, %v1117
        %1119 = vrot.lane.b32.xlu0 %v1041, 20
        %v1120 = vpop.permute.xlu0 %1119
        %1121 = vrot.lane.b32.xlu0 %v1043, 20
        %v1122 = vpop.permute.xlu0 %1121
        %1123 = vrot.lane.b32.xlu0 %v1046, 20
        %v1124 = vpop.permute.xlu0 %1123
        %1125 = vrot.lane.b32.xlu0 %v1048, 20
        %v1126 = vpop.permute.xlu0 %1125
        %1127 = vrot.lane.b32.xlu0 %v1051, 20
        %v1128 = vpop.permute.xlu0 %1127
        %1129 = vrot.lane.b32.xlu0 %v1053, 20
        %v1130 = vpop.permute.xlu0 %1129
        %1131 = vrot.lane.b32.xlu0 %v1056, 20
        %v1132 = vpop.permute.xlu0 %1131
        %1133 = vrot.lane.b32.xlu0 %v1058, 20
        %v1134 = vpop.permute.xlu0 %1133
        %1135 = vrot.lane.b32.xlu0 %v1061, 20
        %v1136 = vpop.permute.xlu0 %1135
        %1137 = vrot.lane.b32.xlu0 %v1063, 20
        %v1138 = vpop.permute.xlu0 %1137
        %1139 = vrot.lane.b32.xlu0 %v1066, 20
        %v1140 = vpop.permute.xlu0 %1139
        %1141 = vrot.lane.b32.xlu0 %v1068, 20
        %v1142 = vpop.permute.xlu0 %1141
        %1143 = vrot.lane.b32.xlu0 %v1071, 20
        %v1144 = vpop.permute.xlu0 %1143
        %1145 = vrot.lane.b32.xlu0 %v1073, 20
        %v1146 = vpop.permute.xlu0 %1145
        %1147 = vrot.lane.b32.xlu0 %v1076, 20
        %v1148 = vpop.permute.xlu0 %1147
        %1149 = vrot.lane.b32.xlu0 %v1078, 20
        %v1150 = vpop.permute.xlu0 %1149
        %1151 = vrot.lane.b32.xlu0 %v1081, 20
        %v1152 = vpop.permute.xlu0 %1151
        %1153 = vrot.lane.b32.xlu0 %v1083, 20
        %v1154 = vpop.permute.xlu0 %1153
        %1155 = vrot.lane.b32.xlu0 %v1086, 20
        %v1156 = vpop.permute.xlu0 %1155
        %1157 = vrot.lane.b32.xlu0 %v1088, 20
        %v1158 = vpop.permute.xlu0 %1157
        %1159 = vrot.lane.b32.xlu0 %v1091, 20
        %v1160 = vpop.permute.xlu0 %1159
        %1161 = vrot.lane.b32.xlu0 %v1093, 20
        %v1162 = vpop.permute.xlu0 %1161
        %1163 = vrot.lane.b32.xlu0 %v1096, 20
        %v1164 = vpop.permute.xlu0 %1163
        %1165 = vrot.lane.b32.xlu0 %v1098, 20
        %v1166 = vpop.permute.xlu0 %1165
        %1167 = vrot.lane.b32.xlu0 %v1101, 20
        %v1168 = vpop.permute.xlu0 %1167
        %1169 = vrot.lane.b32.xlu0 %v1103, 20
        %v1170 = vpop.permute.xlu0 %1169
        %1171 = vrot.lane.b32.xlu0 %v1106, 20
        %v1172 = vpop.permute.xlu0 %1171
        %1173 = vrot.lane.b32.xlu0 %v1108, 20
        %v1174 = vpop.permute.xlu0 %1173
        %1175 = vrot.lane.b32.xlu0 %v1111, 20
        %v1176 = vpop.permute.xlu0 %1175
        %1177 = vrot.lane.b32.xlu0 %v1113, 20
        %v1178 = vpop.permute.xlu0 %1177
        %1179 = vrot.lane.b32.xlu0 %v1116, 20
        %v1180 = vpop.permute.xlu0 %1179
        %1181 = vrot.lane.b32.xlu0 %v1118, 20
        %v1182 = vpop.permute.xlu0 %1181
        %1247 = vrot.lane.b32.xlu0 %v269, 24
        %v1248 = vpop.permute.xlu0 %1247
        %1249 = vrot.lane.b32.xlu0 %v270, 24
        %v1250 = vpop.permute.xlu0 %1249
        %1251 = vrot.lane.b32.xlu0 %v272, 24
        %v1252 = vpop.permute.xlu0 %1251
        %1253 = vrot.lane.b32.xlu0 %v273, 24
        %v1254 = vpop.permute.xlu0 %1253
        %1255 = vrot.lane.b32.xlu0 %v275, 24
        %v1256 = vpop.permute.xlu0 %1255
        %1257 = vrot.lane.b32.xlu0 %v276, 24
        %v1258 = vpop.permute.xlu0 %1257
        %1259 = vrot.lane.b32.xlu0 %v278, 24
        %v1260 = vpop.permute.xlu0 %1259
        %1261 = vrot.lane.b32.xlu0 %v279, 24
        %v1262 = vpop.permute.xlu0 %1261
        %1263 = vrot.lane.b32.xlu0 %v281, 24
        %v1264 = vpop.permute.xlu0 %1263
        %1265 = vrot.lane.b32.xlu0 %v282, 24
        %v1266 = vpop.permute.xlu0 %1265
        %1267 = vrot.lane.b32.xlu0 %v284, 24
        %v1268 = vpop.permute.xlu0 %1267
        %1269 = vrot.lane.b32.xlu0 %v285, 24
        %v1270 = vpop.permute.xlu0 %1269
        %1271 = vrot.lane.b32.xlu0 %v287, 24
        %v1272 = vpop.permute.xlu0 %1271
        %1273 = vrot.lane.b32.xlu0 %v288, 24
        %v1274 = vpop.permute.xlu0 %1273
        %1275 = vrot.lane.b32.xlu0 %v290, 24
        %v1276 = vpop.permute.xlu0 %1275
        %1277 = vrot.lane.b32.xlu0 %v291, 24
        %v1278 = vpop.permute.xlu0 %1277
        %1279 = vrot.lane.b32.xlu0 %v293, 24
        %v1280 = vpop.permute.xlu0 %1279
        %1281 = vrot.lane.b32.xlu0 %v294, 24
        %v1282 = vpop.permute.xlu0 %1281
        %1283 = vrot.lane.b32.xlu0 %v296, 24
        %v1284 = vpop.permute.xlu0 %1283
        %1285 = vrot.lane.b32.xlu0 %v297, 24
        %v1286 = vpop.permute.xlu0 %1285
        %1287 = vrot.lane.b32.xlu0 %v299, 24
        %v1288 = vpop.permute.xlu0 %1287
        %1289 = vrot.lane.b32.xlu0 %v300, 24
        %v1290 = vpop.permute.xlu0 %1289
        %1291 = vrot.lane.b32.xlu0 %v302, 24
        %v1292 = vpop.permute.xlu0 %1291
        %1293 = vrot.lane.b32.xlu0 %v303, 24
        %v1294 = vpop.permute.xlu0 %1293
        %1295 = vrot.lane.b32.xlu0 %v305, 24
        %v1296 = vpop.permute.xlu0 %1295
        %1297 = vrot.lane.b32.xlu0 %v306, 24
        %v1298 = vpop.permute.xlu0 %1297
        %1299 = vrot.lane.b32.xlu0 %v308, 24
        %v1300 = vpop.permute.xlu0 %1299
        %1301 = vrot.lane.b32.xlu0 %v309, 24
        %v1302 = vpop.permute.xlu0 %1301
        %1303 = vrot.lane.b32.xlu0 %v311, 24
        %v1304 = vpop.permute.xlu0 %1303
        %1305 = vrot.lane.b32.xlu0 %v312, 24
        %v1306 = vpop.permute.xlu0 %1305
        %1307 = vrot.lane.b32.xlu0 %v314, 24
        %v1308 = vpop.permute.xlu0 %1307
        %1309 = vrot.lane.b32.xlu0 %v315, 24
        %v1310 = vpop.permute.xlu0 %1309
        %v1359 = vrot.slane %v269, 1
        %v1360 = vrot.slane %v270, 1
        %v1361 = vsel %vm365, %v1359, %v1360
        %v1362 = vrot.slane %v271, 1
        %v1363 = vsel %vm365, %v1360, %v1362
        %v1364 = vrot.slane %v272, 1
        %v1365 = vrot.slane %v273, 1
        %v1366 = vsel %vm365, %v1364, %v1365
        %v1367 = vrot.slane %v274, 1
        %v1368 = vsel %vm365, %v1365, %v1367
        %v1369 = vrot.slane %v275, 1
        %v1370 = vrot.slane %v276, 1
        %v1371 = vsel %vm365, %v1369, %v1370
        %v1372 = vrot.slane %v277, 1
        %v1373 = vsel %vm365, %v1370, %v1372
        %v1374 = vrot.slane %v278, 1
        %v1375 = vrot.slane %v279, 1
        %v1376 = vsel %vm365, %v1374, %v1375
        %v1377 = vrot.slane %v280, 1
        %v1378 = vsel %vm365, %v1375, %v1377
        %v1379 = vrot.slane %v281, 1
        %v1380 = vrot.slane %v282, 1
        %v1381 = vsel %vm365, %v1379, %v1380
        %v1382 = vrot.slane %v283, 1
        %v1383 = vsel %vm365, %v1380, %v1382
        %v1384 = vrot.slane %v284, 1
        %v1385 = vrot.slane %v285, 1
        %v1386 = vsel %vm365, %v1384, %v1385
        %v1387 = vrot.slane %v286, 1
        %v1388 = vsel %vm365, %v1385, %v1387
        %v1389 = vrot.slane %v287, 1
        %v1390 = vrot.slane %v288, 1
        %v1391 = vsel %vm365, %v1389, %v1390
        %v1392 = vrot.slane %v289, 1
        %v1393 = vsel %vm365, %v1390, %v1392
        %v1394 = vrot.slane %v290, 1
        %v1395 = vrot.slane %v291, 1
        %v1396 = vsel %vm365, %v1394, %v1395
        %v1397 = vrot.slane %v292, 1
        %v1398 = vsel %vm365, %v1395, %v1397
        %v1399 = vrot.slane %v293, 1
        %v1400 = vrot.slane %v294, 1
        %v1401 = vsel %vm365, %v1399, %v1400
        %v1402 = vrot.slane %v295, 1
        %v1403 = vsel %vm365, %v1400, %v1402
        %v1404 = vrot.slane %v296, 1
        %v1405 = vrot.slane %v297, 1
        %v1406 = vsel %vm365, %v1404, %v1405
        %v1407 = vrot.slane %v298, 1
        %v1408 = vsel %vm365, %v1405, %v1407
        %v1409 = vrot.slane %v299, 1
        %v1410 = vrot.slane %v300, 1
        %v1411 = vsel %vm365, %v1409, %v1410
        %v1412 = vrot.slane %v301, 1
        %v1413 = vsel %vm365, %v1410, %v1412
        %v1414 = vrot.slane %v302, 1
        %v1415 = vrot.slane %v303, 1
        %v1416 = vsel %vm365, %v1414, %v1415
        %v1417 = vrot.slane %v304, 1
        %v1418 = vsel %vm365, %v1415, %v1417
        %v1419 = vrot.slane %v305, 1
        %v1420 = vrot.slane %v306, 1
        %v1421 = vsel %vm365, %v1419, %v1420
        %v1422 = vrot.slane %v307, 1
        %v1423 = vsel %vm365, %v1420, %v1422
        %v1424 = vrot.slane %v308, 1
        %v1425 = vrot.slane %v309, 1
        %v1426 = vsel %vm365, %v1424, %v1425
        %v1427 = vrot.slane %v310, 1
        %v1428 = vsel %vm365, %v1425, %v1427
        %v1429 = vrot.slane %v311, 1
        %v1430 = vrot.slane %v312, 1
        %v1431 = vsel %vm365, %v1429, %v1430
        %v1432 = vrot.slane %v313, 1
        %v1433 = vsel %vm365, %v1430, %v1432
        %v1434 = vrot.slane %v314, 1
        %v1435 = vrot.slane %v315, 1
        %v1436 = vsel %vm365, %v1434, %v1435
        %v1437 = vrot.slane %v316, 1
        %v1438 = vsel %vm365, %v1435, %v1437
        %1439 = vrot.lane.b32.xlu0 %v1361, 28
        %v1440 = vpop.permute.xlu0 %1439
        %1441 = vrot.lane.b32.xlu0 %v1363, 28
        %v1442 = vpop.permute.xlu0 %1441
        %1443 = vrot.lane.b32.xlu0 %v1366, 28
        %v1444 = vpop.permute.xlu0 %1443
        %1445 = vrot.lane.b32.xlu0 %v1368, 28
        %v1446 = vpop.permute.xlu0 %1445
        %1447 = vrot.lane.b32.xlu0 %v1371, 28
        %v1448 = vpop.permute.xlu0 %1447
        %1449 = vrot.lane.b32.xlu0 %v1373, 28
        %v1450 = vpop.permute.xlu0 %1449
        %1451 = vrot.lane.b32.xlu0 %v1376, 28
        %v1452 = vpop.permute.xlu0 %1451
        %1453 = vrot.lane.b32.xlu0 %v1378, 28
        %v1454 = vpop.permute.xlu0 %1453
        %1455 = vrot.lane.b32.xlu0 %v1381, 28
        %v1456 = vpop.permute.xlu0 %1455
        %1457 = vrot.lane.b32.xlu0 %v1383, 28
        %v1458 = vpop.permute.xlu0 %1457
        %1459 = vrot.lane.b32.xlu0 %v1386, 28
        %v1460 = vpop.permute.xlu0 %1459
        %1461 = vrot.lane.b32.xlu0 %v1388, 28
        %v1462 = vpop.permute.xlu0 %1461
        %1463 = vrot.lane.b32.xlu0 %v1391, 28
        %v1464 = vpop.permute.xlu0 %1463
        %1465 = vrot.lane.b32.xlu0 %v1393, 28
        %v1466 = vpop.permute.xlu0 %1465
        %1467 = vrot.lane.b32.xlu0 %v1396, 28
        %v1468 = vpop.permute.xlu0 %1467
        %1469 = vrot.lane.b32.xlu0 %v1398, 28
        %v1470 = vpop.permute.xlu0 %1469
        %1471 = vrot.lane.b32.xlu0 %v1401, 28
        %v1472 = vpop.permute.xlu0 %1471
        %1473 = vrot.lane.b32.xlu0 %v1403, 28
        %v1474 = vpop.permute.xlu0 %1473
        %1475 = vrot.lane.b32.xlu0 %v1406, 28
        %v1476 = vpop.permute.xlu0 %1475
        %1477 = vrot.lane.b32.xlu0 %v1408, 28
        %v1478 = vpop.permute.xlu0 %1477
        %1479 = vrot.lane.b32.xlu0 %v1411, 28
        %v1480 = vpop.permute.xlu0 %1479
        %1481 = vrot.lane.b32.xlu0 %v1413, 28
        %v1482 = vpop.permute.xlu0 %1481
        %1483 = vrot.lane.b32.xlu0 %v1416, 28
        %v1484 = vpop.permute.xlu0 %1483
        %1485 = vrot.lane.b32.xlu0 %v1418, 28
        %v1486 = vpop.permute.xlu0 %1485
        %1487 = vrot.lane.b32.xlu0 %v1421, 28
        %v1488 = vpop.permute.xlu0 %1487
        %1489 = vrot.lane.b32.xlu0 %v1423, 28
        %v1490 = vpop.permute.xlu0 %1489
        %1491 = vrot.lane.b32.xlu0 %v1426, 28
        %v1492 = vpop.permute.xlu0 %1491
        %1493 = vrot.lane.b32.xlu0 %v1428, 28
        %v1494 = vpop.permute.xlu0 %1493
        %1495 = vrot.lane.b32.xlu0 %v1431, 28
        %v1496 = vpop.permute.xlu0 %1495
        %1497 = vrot.lane.b32.xlu0 %v1433, 28
        %v1498 = vpop.permute.xlu0 %1497
        %1499 = vrot.lane.b32.xlu0 %v1436, 28
        %v1500 = vpop.permute.xlu0 %1499
        %1501 = vrot.lane.b32.xlu0 %v1438, 28
        %v1502 = vpop.permute.xlu0 %1501
        %v1535 = vrot.slane %v269, 2
        %v1536 = vrot.slane %v270, 2
        %v1537 = vsel %vm542, %v1535, %v1536
        %v1538 = vrot.slane %v271, 2
        %v1539 = vsel %vm542, %v1536, %v1538
        %v1540 = vrot.slane %v272, 2
        %v1541 = vrot.slane %v273, 2
        %v1542 = vsel %vm542, %v1540, %v1541
        %v1543 = vrot.slane %v274, 2
        %v1544 = vsel %vm542, %v1541, %v1543
        %v1545 = vrot.slane %v275, 2
        %v1546 = vrot.slane %v276, 2
        %v1547 = vsel %vm542, %v1545, %v1546
        %v1548 = vrot.slane %v277, 2
        %v1549 = vsel %vm542, %v1546, %v1548
        %v1550 = vrot.slane %v278, 2
        %v1551 = vrot.slane %v279, 2
        %v1552 = vsel %vm542, %v1550, %v1551
        %v1553 = vrot.slane %v280, 2
        %v1554 = vsel %vm542, %v1551, %v1553
        %v1555 = vrot.slane %v281, 2
        %v1556 = vrot.slane %v282, 2
        %v1557 = vsel %vm542, %v1555, %v1556
        %v1558 = vrot.slane %v283, 2
        %v1559 = vsel %vm542, %v1556, %v1558
        %v1560 = vrot.slane %v284, 2
        %v1561 = vrot.slane %v285, 2
        %v1562 = vsel %vm542, %v1560, %v1561
        %v1563 = vrot.slane %v286, 2
        %v1564 = vsel %vm542, %v1561, %v1563
        %v1565 = vrot.slane %v287, 2
        %v1566 = vrot.slane %v288, 2
        %v1567 = vsel %vm542, %v1565, %v1566
        %v1568 = vrot.slane %v289, 2
        %v1569 = vsel %vm542, %v1566, %v1568
        %v1570 = vrot.slane %v290, 2
        %v1571 = vrot.slane %v291, 2
        %v1572 = vsel %vm542, %v1570, %v1571
        %v1573 = vrot.slane %v292, 2
        %v1574 = vsel %vm542, %v1571, %v1573
        %v1575 = vrot.slane %v293, 2
        %v1576 = vrot.slane %v294, 2
        %v1577 = vsel %vm542, %v1575, %v1576
        %v1578 = vrot.slane %v295, 2
        %v1579 = vsel %vm542, %v1576, %v1578
        %v1580 = vrot.slane %v296, 2
        %v1581 = vrot.slane %v297, 2
        %v1582 = vsel %vm542, %v1580, %v1581
        %v1583 = vrot.slane %v298, 2
        %v1584 = vsel %vm542, %v1581, %v1583
        %v1585 = vrot.slane %v299, 2
        %v1586 = vrot.slane %v300, 2
        %v1587 = vsel %vm542, %v1585, %v1586
        %v1588 = vrot.slane %v301, 2
        %v1589 = vsel %vm542, %v1586, %v1588
        %v1590 = vrot.slane %v302, 2
        %v1591 = vrot.slane %v303, 2
        %v1592 = vsel %vm542, %v1590, %v1591
        %v1593 = vrot.slane %v304, 2
        %v1594 = vsel %vm542, %v1591, %v1593
        %v1595 = vrot.slane %v305, 2
        %v1596 = vrot.slane %v306, 2
        %v1597 = vsel %vm542, %v1595, %v1596
        %v1598 = vrot.slane %v307, 2
        %v1599 = vsel %vm542, %v1596, %v1598
        %v1600 = vrot.slane %v308, 2
        %v1601 = vrot.slane %v309, 2
        %v1602 = vsel %vm542, %v1600, %v1601
        %v1603 = vrot.slane %v310, 2
        %v1604 = vsel %vm542, %v1601, %v1603
        %v1605 = vrot.slane %v311, 2
        %v1606 = vrot.slane %v312, 2
        %v1607 = vsel %vm542, %v1605, %v1606
        %v1608 = vrot.slane %v313, 2
        %v1609 = vsel %vm542, %v1606, %v1608
        %v1610 = vrot.slane %v314, 2
        %v1611 = vrot.slane %v315, 2
        %v1612 = vsel %vm542, %v1610, %v1611
        %v1613 = vrot.slane %v316, 2
        %v1614 = vsel %vm542, %v1611, %v1613
        %1615 = vrot.lane.b32.xlu0 %v1537, 32
        %v1616 = vpop.permute.xlu0 %1615
        %1617 = vrot.lane.b32.xlu0 %v1539, 32
        %v1618 = vpop.permute.xlu0 %1617
        %1619 = vrot.lane.b32.xlu0 %v1542, 32
        %v1620 = vpop.permute.xlu0 %1619
        %1621 = vrot.lane.b32.xlu0 %v1544, 32
        %v1622 = vpop.permute.xlu0 %1621
        %1623 = vrot.lane.b32.xlu0 %v1547, 32
        %v1624 = vpop.permute.xlu0 %1623
        %1625 = vrot.lane.b32.xlu0 %v1549, 32
        %v1626 = vpop.permute.xlu0 %1625
        %1627 = vrot.lane.b32.xlu0 %v1552, 32
        %v1628 = vpop.permute.xlu0 %1627
        %1629 = vrot.lane.b32.xlu0 %v1554, 32
        %v1630 = vpop.permute.xlu0 %1629
        %1631 = vrot.lane.b32.xlu0 %v1557, 32
        %v1632 = vpop.permute.xlu0 %1631
        %1633 = vrot.lane.b32.xlu0 %v1559, 32
        %v1634 = vpop.permute.xlu0 %1633
        %1635 = vrot.lane.b32.xlu0 %v1562, 32
        %v1636 = vpop.permute.xlu0 %1635
        %1637 = vrot.lane.b32.xlu0 %v1564, 32
        %v1638 = vpop.permute.xlu0 %1637
        %1639 = vrot.lane.b32.xlu0 %v1567, 32
        %v1640 = vpop.permute.xlu0 %1639
        %1641 = vrot.lane.b32.xlu0 %v1569, 32
        %v1642 = vpop.permute.xlu0 %1641
        %1643 = vrot.lane.b32.xlu0 %v1572, 32
        %v1644 = vpop.permute.xlu0 %1643
        %1645 = vrot.lane.b32.xlu0 %v1574, 32
        %v1646 = vpop.permute.xlu0 %1645
        %1647 = vrot.lane.b32.xlu0 %v1577, 32
        %v1648 = vpop.permute.xlu0 %1647
        %1649 = vrot.lane.b32.xlu0 %v1579, 32
        %v1650 = vpop.permute.xlu0 %1649
        %1651 = vrot.lane.b32.xlu0 %v1582, 32
        %v1652 = vpop.permute.xlu0 %1651
        %1653 = vrot.lane.b32.xlu0 %v1584, 32
        %v1654 = vpop.permute.xlu0 %1653
        %1655 = vrot.lane.b32.xlu0 %v1587, 32
        %v1656 = vpop.permute.xlu0 %1655
        %1657 = vrot.lane.b32.xlu0 %v1589, 32
        %v1658 = vpop.permute.xlu0 %1657
        %1659 = vrot.lane.b32.xlu0 %v1592, 32
        %v1660 = vpop.permute.xlu0 %1659
        %1661 = vrot.lane.b32.xlu0 %v1594, 32
        %v1662 = vpop.permute.xlu0 %1661
        %1663 = vrot.lane.b32.xlu0 %v1597, 32
        %v1664 = vpop.permute.xlu0 %1663
        %1665 = vrot.lane.b32.xlu0 %v1599, 32
        %v1666 = vpop.permute.xlu0 %1665
        %1667 = vrot.lane.b32.xlu0 %v1602, 32
        %v1668 = vpop.permute.xlu0 %1667
        %1669 = vrot.lane.b32.xlu0 %v1604, 32
        %v1670 = vpop.permute.xlu0 %1669
        %1671 = vrot.lane.b32.xlu0 %v1607, 32
        %v1672 = vpop.permute.xlu0 %1671
        %1673 = vrot.lane.b32.xlu0 %v1609, 32
        %v1674 = vpop.permute.xlu0 %1673
        %1675 = vrot.lane.b32.xlu0 %v1612, 32
        %v1676 = vpop.permute.xlu0 %1675
        %1677 = vrot.lane.b32.xlu0 %v1614, 32
        %v1678 = vpop.permute.xlu0 %1677
        %vm1711 = vcmask 31744
        %v1712 = vsel %vm1711, %v171, %v447
        %v1713 = vsel %vm1711, %v172, %v449
        %v1714 = vsel %vm1711, %v174, %v451
        %v1715 = vsel %vm1711, %v175, %v453
        %v1716 = vsel %vm1711, %v177, %v455
        %v1717 = vsel %vm1711, %v178, %v457
        %v1718 = vsel %vm1711, %v180, %v459
        %v1719 = vsel %vm1711, %v181, %v461
        %v1720 = vsel %vm1711, %v183, %v463
        %v1721 = vsel %vm1711, %v184, %v465
        %v1722 = vsel %vm1711, %v186, %v467
        %v1723 = vsel %vm1711, %v187, %v469
        %v1724 = vsel %vm1711, %v189, %v471
        %v1725 = vsel %vm1711, %v190, %v473
        %v1726 = vsel %vm1711, %v192, %v475
        %v1727 = vsel %vm1711, %v193, %v477
        %v1728 = vsel %vm1711, %v195, %v479
        %v1729 = vsel %vm1711, %v196, %v481
        %v1730 = vsel %vm1711, %v198, %v483
        %v1731 = vsel %vm1711, %v199, %v485
        %v1732 = vsel %vm1711, %v201, %v487
        %v1733 = vsel %vm1711, %v202, %v489
        %v1734 = vsel %vm1711, %v204, %v491
        %v1735 = vsel %vm1711, %v205, %v493
        %v1736 = vsel %vm1711, %v207, %v495
        %v1737 = vsel %vm1711, %v208, %v497
        %v1738 = vsel %vm1711, %v210, %v499
        %v1739 = vsel %vm1711, %v211, %v501
        %v1740 = vsel %vm1711, %v213, %v503
        %v1741 = vsel %vm1711, %v214, %v505
        %v1742 = vsel %vm1711, %v216, %v507
        %v1743 = vsel %vm1711, %v217, %v509
        %vm1744 = vcmask 64512
        %v1745 = vsel %vm1744, %v1712, %v624
        %v1746 = vsel %vm1744, %v1713, %v626
        %v1747 = vsel %vm1744, %v1714, %v628
        %v1748 = vsel %vm1744, %v1715, %v630
        %v1749 = vsel %vm1744, %v1716, %v632
        %v1750 = vsel %vm1744, %v1717, %v634
        %v1751 = vsel %vm1744, %v1718, %v636
        %v1752 = vsel %vm1744, %v1719, %v638
        %v1753 = vsel %vm1744, %v1720, %v640
        %v1754 = vsel %vm1744, %v1721, %v642
        %v1755 = vsel %vm1744, %v1722, %v644
        %v1756 = vsel %vm1744, %v1723, %v646
        %v1757 = vsel %vm1744, %v1724, %v648
        %v1758 = vsel %vm1744, %v1725, %v650
        %v1759 = vsel %vm1744, %v1726, %v652
        %v1760 = vsel %vm1744, %v1727, %v654
        %v1761 = vsel %vm1744, %v1728, %v656
        %v1762 = vsel %vm1744, %v1729, %v658
        %v1763 = vsel %vm1744, %v1730, %v660
        %v1764 = vsel %vm1744, %v1731, %v662
        %v1765 = vsel %vm1744, %v1732, %v664
        %v1766 = vsel %vm1744, %v1733, %v666
        %v1767 = vsel %vm1744, %v1734, %v668
        %v1768 = vsel %vm1744, %v1735, %v670
        %v1769 = vsel %vm1744, %v1736, %v672
        %v1770 = vsel %vm1744, %v1737, %v674
        %v1771 = vsel %vm1744, %v1738, %v676
        %v1772 = vsel %vm1744, %v1739, %v678
        %v1773 = vsel %vm1744, %v1740, %v680
        %v1774 = vsel %vm1744, %v1741, %v682
        %v1775 = vsel %vm1744, %v1742, %v684
        %v1776 = vsel %vm1744, %v1743, %v686
        %vm1777 = vcmask 97280
        %v1778 = vsel %vm1777, %v1745, %v752
        %v1779 = vsel %vm1777, %v1746, %v754
        %v1780 = vsel %vm1777, %v1747, %v756
        %v1781 = vsel %vm1777, %v1748, %v758
        %v1782 = vsel %vm1777, %v1749, %v760
        %v1783 = vsel %vm1777, %v1750, %v762
        %v1784 = vsel %vm1777, %v1751, %v764
        %v1785 = vsel %vm1777, %v1752, %v766
        %v1786 = vsel %vm1777, %v1753, %v768
        %v1787 = vsel %vm1777, %v1754, %v770
        %v1788 = vsel %vm1777, %v1755, %v772
        %v1789 = vsel %vm1777, %v1756, %v774
        %v1790 = vsel %vm1777, %v1757, %v776
        %v1791 = vsel %vm1777, %v1758, %v778
        %v1792 = vsel %vm1777, %v1759, %v780
        %v1793 = vsel %vm1777, %v1760, %v782
        %v1794 = vsel %vm1777, %v1761, %v784
        %v1795 = vsel %vm1777, %v1762, %v786
        %v1796 = vsel %vm1777, %v1763, %v788
        %v1797 = vsel %vm1777, %v1764, %v790
        %v1798 = vsel %vm1777, %v1765, %v792
        %v1799 = vsel %vm1777, %v1766, %v794
        %v1800 = vsel %vm1777, %v1767, %v796
        %v1801 = vsel %vm1777, %v1768, %v798
        %v1802 = vsel %vm1777, %v1769, %v800
        %v1803 = vsel %vm1777, %v1770, %v802
        %v1804 = vsel %vm1777, %v1771, %v804
        %v1805 = vsel %vm1777, %v1772, %v806
        %v1806 = vsel %vm1777, %v1773, %v808
        %v1807 = vsel %vm1777, %v1774, %v810
        %v1808 = vsel %vm1777, %v1775, %v812
        %v1809 = vsel %vm1777, %v1776, %v814
        %vm1810 = vcmask 130048
        %v1811 = vsel %vm1810, %v1778, %v944
        %v1812 = vsel %vm1810, %v1779, %v946
        %v1813 = vsel %vm1810, %v1780, %v948
        %v1814 = vsel %vm1810, %v1781, %v950
        %v1815 = vsel %vm1810, %v1782, %v952
        %v1816 = vsel %vm1810, %v1783, %v954
        %v1817 = vsel %vm1810, %v1784, %v956
        %v1818 = vsel %vm1810, %v1785, %v958
        %v1819 = vsel %vm1810, %v1786, %v960
        %v1820 = vsel %vm1810, %v1787, %v962
        %v1821 = vsel %vm1810, %v1788, %v964
        %v1822 = vsel %vm1810, %v1789, %v966
        %v1823 = vsel %vm1810, %v1790, %v968
        %v1824 = vsel %vm1810, %v1791, %v970
        %v1825 = vsel %vm1810, %v1792, %v972
        %v1826 = vsel %vm1810, %v1793, %v974
        %v1827 = vsel %vm1810, %v1794, %v976
        %v1828 = vsel %vm1810, %v1795, %v978
        %v1829 = vsel %vm1810, %v1796, %v980
        %v1830 = vsel %vm1810, %v1797, %v982
        %v1831 = vsel %vm1810, %v1798, %v984
        %v1832 = vsel %vm1810, %v1799, %v986
        %v1833 = vsel %vm1810, %v1800, %v988
        %v1834 = vsel %vm1810, %v1801, %v990
        %v1835 = vsel %vm1810, %v1802, %v992
        %v1836 = vsel %vm1810, %v1803, %v994
        %v1837 = vsel %vm1810, %v1804, %v996
        %v1838 = vsel %vm1810, %v1805, %v998
        %v1839 = vsel %vm1810, %v1806, %v1000
        %v1840 = vsel %vm1810, %v1807, %v1002
        %v1841 = vsel %vm1810, %v1808, %v1004
        %v1842 = vsel %vm1810, %v1809, %v1006
        %vm1843 = vcmask 162816
        %v1844 = vsel %vm1843, %v1811, %v1120
        %v1845 = vsel %vm1843, %v1812, %v1122
        %v1846 = vsel %vm1843, %v1813, %v1124
        %v1847 = vsel %vm1843, %v1814, %v1126
        %v1848 = vsel %vm1843, %v1815, %v1128
        %v1849 = vsel %vm1843, %v1816, %v1130
        %v1850 = vsel %vm1843, %v1817, %v1132
        %v1851 = vsel %vm1843, %v1818, %v1134
        %v1852 = vsel %vm1843, %v1819, %v1136
        %v1853 = vsel %vm1843, %v1820, %v1138
        %v1854 = vsel %vm1843, %v1821, %v1140
        %v1855 = vsel %vm1843, %v1822, %v1142
        %v1856 = vsel %vm1843, %v1823, %v1144
        %v1857 = vsel %vm1843, %v1824, %v1146
        %v1858 = vsel %vm1843, %v1825, %v1148
        %v1859 = vsel %vm1843, %v1826, %v1150
        %v1860 = vsel %vm1843, %v1827, %v1152
        %v1861 = vsel %vm1843, %v1828, %v1154
        %v1862 = vsel %vm1843, %v1829, %v1156
        %v1863 = vsel %vm1843, %v1830, %v1158
        %v1864 = vsel %vm1843, %v1831, %v1160
        %v1865 = vsel %vm1843, %v1832, %v1162
        %v1866 = vsel %vm1843, %v1833, %v1164
        %v1867 = vsel %vm1843, %v1834, %v1166
        %v1868 = vsel %vm1843, %v1835, %v1168
        %v1869 = vsel %vm1843, %v1836, %v1170
        %v1870 = vsel %vm1843, %v1837, %v1172
        %v1871 = vsel %vm1843, %v1838, %v1174
        %v1872 = vsel %vm1843, %v1839, %v1176
        %v1873 = vsel %vm1843, %v1840, %v1178
        %v1874 = vsel %vm1843, %v1841, %v1180
        %v1875 = vsel %vm1843, %v1842, %v1182
        %vm1876 = vcmask 195584
        %v1877 = vsel %vm1876, %v1844, %v1248
        %v1878 = vsel %vm1876, %v1845, %v1250
        %v1879 = vsel %vm1876, %v1846, %v1252
        %v1880 = vsel %vm1876, %v1847, %v1254
        %v1881 = vsel %vm1876, %v1848, %v1256
        %v1882 = vsel %vm1876, %v1849, %v1258
        %v1883 = vsel %vm1876, %v1850, %v1260
        %v1884 = vsel %vm1876, %v1851, %v1262
        %v1885 = vsel %vm1876, %v1852, %v1264
        %v1886 = vsel %vm1876, %v1853, %v1266
        %v1887 = vsel %vm1876, %v1854, %v1268
        %v1888 = vsel %vm1876, %v1855, %v1270
        %v1889 = vsel %vm1876, %v1856, %v1272
        %v1890 = vsel %vm1876, %v1857, %v1274
        %v1891 = vsel %vm1876, %v1858, %v1276
        %v1892 = vsel %vm1876, %v1859, %v1278
        %v1893 = vsel %vm1876, %v1860, %v1280
        %v1894 = vsel %vm1876, %v1861, %v1282
        %v1895 = vsel %vm1876, %v1862, %v1284
        %v1896 = vsel %vm1876, %v1863, %v1286
        %v1897 = vsel %vm1876, %v1864, %v1288
        %v1898 = vsel %vm1876, %v1865, %v1290
        %v1899 = vsel %vm1876, %v1866, %v1292
        %v1900 = vsel %vm1876, %v1867, %v1294
        %v1901 = vsel %vm1876, %v1868, %v1296
        %v1902 = vsel %vm1876, %v1869, %v1298
        %v1903 = vsel %vm1876, %v1870, %v1300
        %v1904 = vsel %vm1876, %v1871, %v1302
        %v1905 = vsel %vm1876, %v1872, %v1304
        %v1906 = vsel %vm1876, %v1873, %v1306
        %v1907 = vsel %vm1876, %v1874, %v1308
        %v1908 = vsel %vm1876, %v1875, %v1310
        %vm1909 = vcmask 228352
        %v1910 = vsel %vm1909, %v1877, %v1440
        %v1911 = vsel %vm1909, %v1878, %v1442
        %v1912 = vsel %vm1909, %v1879, %v1444
        %v1913 = vsel %vm1909, %v1880, %v1446
        %v1914 = vsel %vm1909, %v1881, %v1448
        %v1915 = vsel %vm1909, %v1882, %v1450
        %v1916 = vsel %vm1909, %v1883, %v1452
        %v1917 = vsel %vm1909, %v1884, %v1454
        %v1918 = vsel %vm1909, %v1885, %v1456
        %v1919 = vsel %vm1909, %v1886, %v1458
        %v1920 = vsel %vm1909, %v1887, %v1460
        %v1921 = vsel %vm1909, %v1888, %v1462
        %v1922 = vsel %vm1909, %v1889, %v1464
        %v1923 = vsel %vm1909, %v1890, %v1466
        %v1924 = vsel %vm1909, %v1891, %v1468
        %v1925 = vsel %vm1909, %v1892, %v1470
        %v1926 = vsel %vm1909, %v1893, %v1472
        %v1927 = vsel %vm1909, %v1894, %v1474
        %v1928 = vsel %vm1909, %v1895, %v1476
        %v1929 = vsel %vm1909, %v1896, %v1478
        %v1930 = vsel %vm1909, %v1897, %v1480
        %v1931 = vsel %vm1909, %v1898, %v1482
        %v1932 = vsel %vm1909, %v1899, %v1484
        %v1933 = vsel %vm1909, %v1900, %v1486
        %v1934 = vsel %vm1909, %v1901, %v1488
        %v1935 = vsel %vm1909, %v1902, %v1490
        %v1936 = vsel %vm1909, %v1903, %v1492
        %v1937 = vsel %vm1909, %v1904, %v1494
        %v1938 = vsel %vm1909, %v1905, %v1496
        %v1939 = vsel %vm1909, %v1906, %v1498
        %v1940 = vsel %vm1909, %v1907, %v1500
        %v1941 = vsel %vm1909, %v1908, %v1502
        %vm1942 = vcmask 261120
        %v1943 = vsel %vm1942, %v1910, %v1616
        %v1944 = vsel %vm1942, %v1911, %v1618
        %v1945 = vsel %vm1942, %v1912, %v1620
        %v1946 = vsel %vm1942, %v1913, %v1622
        %v1947 = vsel %vm1942, %v1914, %v1624
        %v1948 = vsel %vm1942, %v1915, %v1626
        %v1949 = vsel %vm1942, %v1916, %v1628
        %v1950 = vsel %vm1942, %v1917, %v1630
        %v1951 = vsel %vm1942, %v1918, %v1632
        %v1952 = vsel %vm1942, %v1919, %v1634
        %v1953 = vsel %vm1942, %v1920, %v1636
        %v1954 = vsel %vm1942, %v1921, %v1638
        %v1955 = vsel %vm1942, %v1922, %v1640
        %v1956 = vsel %vm1942, %v1923, %v1642
        %v1957 = vsel %vm1942, %v1924, %v1644
        %v1958 = vsel %vm1942, %v1925, %v1646
        %v1959 = vsel %vm1942, %v1926, %v1648
        %v1960 = vsel %vm1942, %v1927, %v1650
        %v1961 = vsel %vm1942, %v1928, %v1652
        %v1962 = vsel %vm1942, %v1929, %v1654
        %v1963 = vsel %vm1942, %v1930, %v1656
        %v1964 = vsel %vm1942, %v1931, %v1658
        %v1965 = vsel %vm1942, %v1932, %v1660
        %v1966 = vsel %vm1942, %v1933, %v1662
        %v1967 = vsel %vm1942, %v1934, %v1664
        %v1968 = vsel %vm1942, %v1935, %v1666
        %v1969 = vsel %vm1942, %v1936, %v1668
        %v1970 = vsel %vm1942, %v1937, %v1670
        %v1971 = vsel %vm1942, %v1938, %v1672
        %v1972 = vsel %vm1942, %v1939, %v1674
        %v1973 = vsel %vm1942, %v1940, %v1676
        %v1974 = vsel %vm1942, %v1941, %v1678
        %v1975 = vld [vmem:[%s1] sm:$0xff]
        %v1976 = vld [vmem:[%s1 + $0x8] sm:$0xff]
        %v1977 = vld [vmem:[%s1 + $0x10] sm:$0xff]
        %v1978 = vld [vmem:[%s1 + $0x18] sm:$0xff]
        %v1979 = vld [vmem:[%s1 + $0x20] sm:$0xf]
        %vm1980 = vcmask 293888
        %v1982 = vsel %vm1980, %v1943, 0
        %v1985 = vsel %vm1980, %v1944, 0
        %v1988 = vsel %vm1980, %v1945, 0
        %v1991 = vsel %vm1980, %v1946, 0
        %v1994 = vsel %vm1980, %v1947, 0
        %v1997 = vsel %vm1980, %v1948, 0
        %v2000 = vsel %vm1980, %v1949, 0
        %v2003 = vsel %vm1980, %v1950, 0
        %v2006 = vsel %vm1980, %v1951, 0
        %v2009 = vsel %vm1980, %v1952, 0
        %v2012 = vsel %vm1980, %v1953, 0
        %v2015 = vsel %vm1980, %v1954, 0
        %v2018 = vsel %vm1980, %v1955, 0
        %v2021 = vsel %vm1980, %v1956, 0
        %v2024 = vsel %vm1980, %v1957, 0
        %v2027 = vsel %vm1980, %v1958, 0
        %v2030 = vsel %vm1980, %v1959, 0
        %v2033 = vsel %vm1980, %v1960, 0
        %v2036 = vsel %vm1980, %v1961, 0
        %v2039 = vsel %vm1980, %v1962, 0
        %v2042 = vsel %vm1980, %v1963, 0
        %v2045 = vsel %vm1980, %v1964, 0
        %v2048 = vsel %vm1980, %v1965, 0
        %v2051 = vsel %vm1980, %v1966, 0
        %v2054 = vsel %vm1980, %v1967, 0
        %v2057 = vsel %vm1980, %v1968, 0
        %v2060 = vsel %vm1980, %v1969, 0
        %v2063 = vsel %vm1980, %v1970, 0
        %v2066 = vsel %vm1980, %v1971, 0
        %v2069 = vsel %vm1980, %v1972, 0
        %v2072 = vsel %vm1980, %v1973, 0
        %v2075 = vsel %vm1980, %v1974, 0
        %vm2077 = vcmask 1043456
        %v2079 = vsel %vm2077, %v1979, 0
        %2081 = vmatpush.msra.mxu0 0.0
        %2082 = vmatpush.msra.mxu0 0.0
        %2083 = vmatpush.msra.mxu0 0.0
        %2084 = vmatpush.msra.mxu0 0.0
        %2085 = vmatpush.msra.mxu0 0.0
        %2086 = vmatpush.msra.mxu0 0.0
        %2087 = vmatpush.msra.mxu0 0.0
        %2088 = vmatpush.msra.mxu0 0.0
        %2089 = vmatpush.msra.mxu0 0.0
        %2090 = vmatpush.msra.mxu0 0.0
        %2091 = vmatpush.msra.mxu0 0.0
        %2092 = vmatpush.msra.mxu0 %v2079
        %2093 = vmatpush.msra.mxu0 %v1978
        %2094 = vmatpush.msra.mxu0 %v1977
        %2095 = vmatpush.msra.mxu0 %v1976
        %2096 = vmatpush.msra.mxu0 %v1975
        %2097 = vmatmul.f32.gmra.mxu0 %v1982
        %v2098 = vpop.f32.mrf.mxu0
        %v2099 = vadd.f32 0.0, %v2098
        %2100 = vmatmul.f32.gmra.mxu0 %v1985
        %v2101 = vpop.f32.mrf.mxu0
        %v2102 = vadd.f32 0.0, %v2101
        %2103 = vmatmul.f32.gmra.mxu0 %v1988
        %v2104 = vpop.f32.mrf.mxu0
        %v2105 = vadd.f32 0.0, %v2104
        %2106 = vmatmul.f32.gmra.mxu0 %v1991
        %v2107 = vpop.f32.mrf.mxu0
        %v2108 = vadd.f32 0.0, %v2107
        %2109 = vmatmul.f32.gmra.mxu0 %v1994
        %v2110 = vpop.f32.mrf.mxu0
        %v2111 = vadd.f32 0.0, %v2110
        %2112 = vmatmul.f32.gmra.mxu0 %v1997
        %v2113 = vpop.f32.mrf.mxu0
        %v2114 = vadd.f32 0.0, %v2113
        %2115 = vmatmul.f32.gmra.mxu0 %v2000
        %v2116 = vpop.f32.mrf.mxu0
        %v2117 = vadd.f32 0.0, %v2116
        %2118 = vmatmul.f32.gmra.mxu0 %v2003
        %v2119 = vpop.f32.mrf.mxu0
        %v2120 = vadd.f32 0.0, %v2119
        %2121 = vmatmul.f32.gmra.mxu0 %v2006
        %v2122 = vpop.f32.mrf.mxu0
        %v2123 = vadd.f32 0.0, %v2122
        %2124 = vmatmul.f32.gmra.mxu0 %v2009
        %v2125 = vpop.f32.mrf.mxu0
        %v2126 = vadd.f32 0.0, %v2125
        %2127 = vmatmul.f32.gmra.mxu0 %v2012
        %v2128 = vpop.f32.mrf.mxu0
        %v2129 = vadd.f32 0.0, %v2128
        %2130 = vmatmul.f32.gmra.mxu0 %v2015
        %v2131 = vpop.f32.mrf.mxu0
        %v2132 = vadd.f32 0.0, %v2131
        %2133 = vmatmul.f32.gmra.mxu0 %v2018
        %v2134 = vpop.f32.mrf.mxu0
        %v2135 = vadd.f32 0.0, %v2134
        %2136 = vmatmul.f32.gmra.mxu0 %v2021
        %v2137 = vpop.f32.mrf.mxu0
        %v2138 = vadd.f32 0.0, %v2137
        %2139 = vmatmul.f32.gmra.mxu0 %v2024
        %v2140 = vpop.f32.mrf.mxu0
        %v2141 = vadd.f32 0.0, %v2140
        %2142 = vmatmul.f32.gmra.mxu0 %v2027
        %v2143 = vpop.f32.mrf.mxu0
        %v2144 = vadd.f32 0.0, %v2143
        %2145 = vmatmul.f32.gmra.mxu0 %v2030
        %v2146 = vpop.f32.mrf.mxu0
        %v2147 = vadd.f32 0.0, %v2146
        %2148 = vmatmul.f32.gmra.mxu0 %v2033
        %v2149 = vpop.f32.mrf.mxu0
        %v2150 = vadd.f32 0.0, %v2149
        %2151 = vmatmul.f32.gmra.mxu0 %v2036
        %v2152 = vpop.f32.mrf.mxu0
        %v2153 = vadd.f32 0.0, %v2152
        %2154 = vmatmul.f32.gmra.mxu0 %v2039
        %v2155 = vpop.f32.mrf.mxu0
        %v2156 = vadd.f32 0.0, %v2155
        %2157 = vmatmul.f32.gmra.mxu0 %v2042
        %v2158 = vpop.f32.mrf.mxu0
        %v2159 = vadd.f32 0.0, %v2158
        %2160 = vmatmul.f32.gmra.mxu0 %v2045
        %v2161 = vpop.f32.mrf.mxu0
        %v2162 = vadd.f32 0.0, %v2161
        %2163 = vmatmul.f32.gmra.mxu0 %v2048
        %v2164 = vpop.f32.mrf.mxu0
        %v2165 = vadd.f32 0.0, %v2164
        %2166 = vmatmul.f32.gmra.mxu0 %v2051
        %v2167 = vpop.f32.mrf.mxu0
        %v2168 = vadd.f32 0.0, %v2167
        %2169 = vmatmul.f32.gmra.mxu0 %v2054
        %v2170 = vpop.f32.mrf.mxu0
        %v2171 = vadd.f32 0.0, %v2170
        %2172 = vmatmul.f32.gmra.mxu0 %v2057
        %v2173 = vpop.f32.mrf.mxu0
        %v2174 = vadd.f32 0.0, %v2173
        %2175 = vmatmul.f32.gmra.mxu0 %v2060
        %v2176 = vpop.f32.mrf.mxu0
        %v2177 = vadd.f32 0.0, %v2176
        %2178 = vmatmul.f32.gmra.mxu0 %v2063
        %v2179 = vpop.f32.mrf.mxu0
        %v2180 = vadd.f32 0.0, %v2179
        %2181 = vmatmul.f32.gmra.mxu0 %v2066
        %v2182 = vpop.f32.mrf.mxu0
        %v2183 = vadd.f32 0.0, %v2182
        %2184 = vmatmul.f32.gmra.mxu0 %v2069
        %v2185 = vpop.f32.mrf.mxu0
        %v2186 = vadd.f32 0.0, %v2185
        %2187 = vmatmul.f32.gmra.mxu0 %v2072
        %v2188 = vpop.f32.mrf.mxu0
        %v2189 = vadd.f32 0.0, %v2188
        %2190 = vmatmul.f32.gmra.mxu0 %v2075
        %v2191 = vpop.f32.mrf.mxu0
        %v2192 = vadd.f32 0.0, %v2191
        %2193 = vdwg.mxu0
        %v2194 = vadd.f32 %v2099, %v2102
        %v2195 = vadd.f32 %v2194, %v2105
        %v2196 = vadd.f32 %v2195, %v2108
        %v2197 = vadd.f32 %v2196, %v2111
        %v2198 = vadd.f32 %v2197, %v2114
        %v2199 = vadd.f32 %v2198, %v2117
        %v2200 = vadd.f32 %v2199, %v2120
        %v2201 = vadd.f32 %v2200, %v2123
        %v2202 = vadd.f32 %v2201, %v2126
        %v2203 = vadd.f32 %v2202, %v2129
        %v2204 = vadd.f32 %v2203, %v2132
        %v2205 = vadd.f32 %v2204, %v2135
        %v2206 = vadd.f32 %v2205, %v2138
        %v2207 = vadd.f32 %v2206, %v2141
        %v2208 = vadd.f32 %v2207, %v2144
        %v2209 = vadd.f32 %v2208, %v2147
        %v2210 = vadd.f32 %v2209, %v2150
        %v2211 = vadd.f32 %v2210, %v2153
        %v2212 = vadd.f32 %v2211, %v2156
        %v2213 = vadd.f32 %v2212, %v2159
        %v2214 = vadd.f32 %v2213, %v2162
        %v2215 = vadd.f32 %v2214, %v2165
        %v2216 = vadd.f32 %v2215, %v2168
        %v2217 = vadd.f32 %v2216, %v2171
        %v2218 = vadd.f32 %v2217, %v2174
        %v2219 = vadd.f32 %v2218, %v2177
        %v2220 = vadd.f32 %v2219, %v2180
        %v2221 = vadd.f32 %v2220, %v2183
        %v2222 = vadd.f32 %v2221, %v2186
        %v2223 = vadd.f32 %v2222, %v2189
        %v2224 = vadd.f32 %v2223, %v2192
        %v2225 = vrot.slane %v2224, 4
        %v2226 = vadd.f32 %v2224, %v2225
        %v2227 = vrot.slane %v2226, 2
        %v2228 = vadd.f32 %v2226, %v2227
        %v2229 = vrot.slane %v2228, 1
        %v2230 = vadd.f32 %v2228, %v2229
        %v2231 = vadd.f32 %v2230, 0.0
        %v2232 = vmul.f32 %v2099, %v2099
        %v2233 = vmul.f32 %v2102, %v2102
        %v2234 = vmul.f32 %v2105, %v2105
        %v2235 = vmul.f32 %v2108, %v2108
        %v2236 = vmul.f32 %v2111, %v2111
        %v2237 = vmul.f32 %v2114, %v2114
        %v2238 = vmul.f32 %v2117, %v2117
        %v2239 = vmul.f32 %v2120, %v2120
        %v2240 = vmul.f32 %v2123, %v2123
        %v2241 = vmul.f32 %v2126, %v2126
        %v2242 = vmul.f32 %v2129, %v2129
        %v2243 = vmul.f32 %v2132, %v2132
        %v2244 = vmul.f32 %v2135, %v2135
        %v2245 = vmul.f32 %v2138, %v2138
        %v2246 = vmul.f32 %v2141, %v2141
        %v2247 = vmul.f32 %v2144, %v2144
        %v2248 = vmul.f32 %v2147, %v2147
        %v2249 = vmul.f32 %v2150, %v2150
        %v2250 = vmul.f32 %v2153, %v2153
        %v2251 = vmul.f32 %v2156, %v2156
        %v2252 = vmul.f32 %v2159, %v2159
        %v2253 = vmul.f32 %v2162, %v2162
        %v2254 = vmul.f32 %v2165, %v2165
        %v2255 = vmul.f32 %v2168, %v2168
        %v2256 = vmul.f32 %v2171, %v2171
        %v2257 = vmul.f32 %v2174, %v2174
        %v2258 = vmul.f32 %v2177, %v2177
        %v2259 = vmul.f32 %v2180, %v2180
        %v2260 = vmul.f32 %v2183, %v2183
        %v2261 = vmul.f32 %v2186, %v2186
        %v2262 = vmul.f32 %v2189, %v2189
        %v2263 = vmul.f32 %v2192, %v2192
        %v2264 = vadd.f32 %v2232, %v2233
        %v2265 = vadd.f32 %v2264, %v2234
        %v2266 = vadd.f32 %v2265, %v2235
        %v2267 = vadd.f32 %v2266, %v2236
        %v2268 = vadd.f32 %v2267, %v2237
        %v2269 = vadd.f32 %v2268, %v2238
        %v2270 = vadd.f32 %v2269, %v2239
        %v2271 = vadd.f32 %v2270, %v2240
        %v2272 = vadd.f32 %v2271, %v2241
        %v2273 = vadd.f32 %v2272, %v2242
        %v2274 = vadd.f32 %v2273, %v2243
        %v2275 = vadd.f32 %v2274, %v2244
        %v2276 = vadd.f32 %v2275, %v2245
        %v2277 = vadd.f32 %v2276, %v2246
        %v2278 = vadd.f32 %v2277, %v2247
        %v2279 = vadd.f32 %v2278, %v2248
        %v2280 = vadd.f32 %v2279, %v2249
        %v2281 = vadd.f32 %v2280, %v2250
        %v2282 = vadd.f32 %v2281, %v2251
        %v2283 = vadd.f32 %v2282, %v2252
        %v2284 = vadd.f32 %v2283, %v2253
        %v2285 = vadd.f32 %v2284, %v2254
        %v2286 = vadd.f32 %v2285, %v2255
        %v2287 = vadd.f32 %v2286, %v2256
        %v2288 = vadd.f32 %v2287, %v2257
        %v2289 = vadd.f32 %v2288, %v2258
        %v2290 = vadd.f32 %v2289, %v2259
        %v2291 = vadd.f32 %v2290, %v2260
        %v2292 = vadd.f32 %v2291, %v2261
        %v2293 = vadd.f32 %v2292, %v2262
        %v2294 = vadd.f32 %v2293, %v2263
        %v2295 = vrot.slane %v2294, 4
        %v2296 = vadd.f32 %v2294, %v2295
        %v2297 = vrot.slane %v2296, 2
        %v2298 = vadd.f32 %v2296, %v2297
        %v2299 = vrot.slane %v2298, 1
        %v2300 = vadd.f32 %v2298, %v2299
        %v2301 = vadd.f32 %v2300, 0.0
        %2302 = vst [vmem:[%s160] sm:$0x1] %v2231
        %2303 = vst [vmem:[%s160 + $0x1] sm:$0x1] %v2301
        %s2304 = sand.u32 %s87, 1
        %s2305 = scalar_lea.sflag [#allocation3], %s2304
        %s2306 = sand.u32 %s87, 1
        %s2307 = smul.addr %s2306, 2
        %s2308 = scalar_lea.vmem [#allocation2], %s2307
        // Predicated region
        $region29: #{tpu_custom_call.1} parent=27 // pred_check
          %p2309 = pneg %p97
        $region30: #{tpu_custom_call.1} parent=27 // pred_check_branch
          %2311 = sbr.rel (%p2309) target = $region32
        $region31: #{tpu_custom_call.1} parent=27 // pred_region
          %s2312 = sadd.s32 %s20, %s21
          %2314 = vsyncadd %s2305, 0
          %s2315 = smul.addr %s2312, 2
          %s2316 = scalar_lea.hbm %s2, %s2315
          %s2318 = sshll.u32 %s2308, 4
          %s2319 = int_to_ptr.vmem [resolvable:$true] %s2318
          %s2320 = sshll.u32 %s2316, 4
          %s2321 = int_to_ptr.hbm [resolvable:$true] %s2320
          %2323 = dma.vmem_to_hbm [thread:$0]  %s2319, 32, %s2321, %s2305
        $region32: #{tpu_custom_call.1} parent=27 // pred_fallthru
          _
      $region28: #{tpu_custom_call.1} parent=5 // pred_fallthru
        _
      %p2324 = scmp.le.s32.totalorder 2, %s11
      // Predicated region
      $region33: #{tpu_custom_call.1} parent=5 // pred_check
        %p2325 = pneg %p2324
      $region34: #{tpu_custom_call.1} parent=5 // pred_check_branch
        %2327 = sbr.rel (%p2325) target = $region36
      $region35: #{tpu_custom_call.1} parent=5 // pred_region
        %s2328 = ssub.s32 %s11, 2
        // Predicated region
        $region37: #{tpu_custom_call.1} parent=35 // pred_check
          %p2329 = pneg %p103
        $region38: #{tpu_custom_call.1} parent=35 // pred_check_branch
          %2331 = sbr.rel (%p2329) target = $region40
        $region39: #{tpu_custom_call.1} parent=35 // pred_region
          %s2332 = sand.u32 %s88, 1
          %s2333 = scalar_lea.sflag [#allocation3], %s2332
          %s2334 = sand.u32 %s88, 1
          %s2335 = smul.addr %s2334, 2
          %s2336 = scalar_lea.vmem [#allocation2], %s2335
          %2338 = dma.done %s2333, 32
        $region40: #{tpu_custom_call.1} parent=35 // pred_fallthru
          _
      $region36: #{tpu_custom_call.1} parent=5 // pred_fallthru
        _
    $region6: #{tpu_custom_call.1} parent=1 // loop_footer
      %s15 = sadd.s32 1, %s11
    $region7: #{tpu_custom_call.1} parent=1 // loop_footer_branch
      %10 = sbr.rel target = $region3
    $region8: #{tpu_custom_call.1} parent=1 // loop_exit
      _
    %2339 = vsyncpa [#allocation3], 1
    %s2340 = scalar_lea.sflag [#allocation3], 1
    %2341 = vsyncpa %s2340, 1

</llo_original>
